<compile_context>
chip_gen: v5e
topology: v5e:2x2
jax: 0.10.0
libtpu: 0.0.40
codegen_flags: <defaults>
</compile_context>

<pallas_src>
import functools

import jax
import jax.numpy as jnp
from jax.experimental import pallas as pl
from jax.experimental.pallas import tpu as pltpu


def _round_up(x, m):
    return ((x + m - 1) // m) * m


# -----------------------------------------------------------------------------
# Fused per-(layer, query-tile) loss kernel.
#
# Block shapes per grid step (l, q):
#   logits_ref : (1, TQ, C)   bf16   queries on sublanes, classes on lanes
#   src_ref    : (1, 8, TQ)   f32    rows [cx, cy, w, h, px, py, obj, 0]
#   tgt_ref    : (8, TQ)      f32    rows [tcx, tcy, tw, th, match, qvalid, 0, 0]
#   tcls_ref   : (TQ, 1)      int32  target class id (num_classes = "no object")
#   qv_ref     : (TQ, 1)      f32    1.0 for real (non-pad) queries
#   out_ref    : (1, 8, 128)  f32    rows 0..4 accumulate
#                                    [ce, ce_obj, bbox_l1, giou, inner] sums
# -----------------------------------------------------------------------------
def _criterion_kernel(logits_ref, src_ref, tgt_ref, tcls_ref, qv_ref, out_ref,
                      *, alpha, gamma):
    f32 = jnp.float32
    qt = pl.program_id(1)

    @pl.when(qt == 0)
    def _init():
        out_ref[...] = jnp.zeros_like(out_ref)

    # --- classification focal loss (one-hot built in-kernel, natural layout) --
    x = logits_ref[0].astype(f32)                                  # (TQ, C)
    tcls = tcls_ref[...]                                           # (TQ, 1) int32
    qv_col = qv_ref[...].astype(f32)                               # (TQ, 1)

    cls_iota = jax.lax.broadcasted_iota(jnp.int32, x.shape, 1)     # class id per lane
    t_bool = cls_iota == tcls                                      # (TQ, C)
    t = t_bool.astype(f32)

    e = jnp.exp(-jnp.abs(x))
    inv = pl.reciprocal(1.0 + e, approx=True)
    prob = jnp.where(x >= 0.0, inv, e * inv)                       # sigmoid(x)
    ce = jnp.maximum(x, 0.0) - x * t + jnp.log1p(e)                # BCE with logits
    p_t = prob * t + (1.0 - prob) * (1.0 - t)
    qq = 1.0 - p_t
    mod = qq * qq if gamma == 2.0 else qq ** gamma
    # t is binary here: alpha_t = where(t, a, 1-a); fuse the query-valid mask in.
    if alpha >= 0:
        aw = jnp.where(t_bool, alpha, 1.0 - alpha) * qv_col
    else:
        aw = jnp.broadcast_to(qv_col, x.shape)
    ce_sum = jnp.sum(ce * mod * aw)

    # --- box geometry: coordinates are sublane rows, queries are lanes -------
    src = src_ref[0].astype(f32)                                   # (8, TQ)
    tgt = tgt_ref[...].astype(f32)                                 # (8, TQ)

    s0 = src[0:2, :] - 0.5 * src[2:4, :]                           # (2, TQ) [x0; y0]
    s1 = src[0:2, :] + 0.5 * src[2:4, :]                           # (2, TQ) [x1; y1]
    t0 = tgt[0:2, :] - 0.5 * tgt[2:4, :]
    t1 = tgt[0:2, :] + 0.5 * tgt[2:4, :]
    pts = src[4:6, :]                                              # (2, TQ)
    x_obj = src[6:7, :]                                            # (1, TQ)
    mm = tgt[4:5, :]                                               # (1, TQ) match mask
    qv_lane = tgt[5:6, :]                                          # (1, TQ)

    # L1 on xyxy corners (the SAP-DETR reference converts before l1_loss).
    l1 = jnp.abs(s0 - t0) + jnp.abs(s1 - t1)                       # (2, TQ)
    l1_sum = jnp.sum(l1 * mm)

    # paired IoU
    iwh = jnp.maximum(jnp.minimum(s1, t1) - jnp.maximum(s0, t0), 0.0)
    inter = iwh[0:1, :] * iwh[1:2, :]
    swh = s1 - s0
    twh = t1 - t0
    union = swh[0:1, :] * swh[1:2, :] + twh[0:1, :] * twh[1:2, :] - inter
    iou = jnp.where(union > 0.0,
                    inter / jnp.where(union > 0.0, union, 1.0), 0.0)

    # generalized IoU
    cwh = jnp.maximum(jnp.maximum(s1, t1) - jnp.minimum(s0, t0), 0.0)
    area_c = cwh[0:1, :] * cwh[1:2, :]
    giou = iou - jnp.where(
        area_c > 0.0,
        (area_c - union) / jnp.where(area_c > 0.0, area_c, 1.0), 0.0)
    giou_sum = jnp.sum((1.0 - giou) * mm)

    # inner loss: is the reference point inside the target box?
    d = jnp.minimum(pts - t0, t1 - pts)                            # (2, TQ)
    mind = jnp.minimum(d[0:1, :], d[1:2, :])
    inner_sum = jnp.sum((1.0 - (mind >= 0.0).astype(f32)) * mm)

    # --- objectness focal loss (target = matched IoU, else 0; continuous t) --
    t_obj = iou * mm
    eo = jnp.exp(-jnp.abs(x_obj))
    invo = pl.reciprocal(1.0 + eo, approx=True)
    probo = jnp.where(x_obj >= 0.0, invo, eo * invo)
    ceo = jnp.maximum(x_obj, 0.0) - x_obj * t_obj + jnp.log1p(eo)
    pto = probo * t_obj + (1.0 - probo) * (1.0 - t_obj)
    qo = 1.0 - pto
    modo = qo * qo if gamma == 2.0 else qo ** gamma
    lobj = ceo * modo
    if alpha >= 0:
        lobj = (alpha * t_obj + (1.0 - alpha) * (1.0 - t_obj)) * lobj
    obj_sum = jnp.sum(lobj * qv_lane)

    # --- accumulate into the resident output block (direct row-slice adds) ---
    for r, v in ((0, ce_sum), (1, obj_sum), (2, l1_sum),
                 (3, giou_sum), (4, inner_sum)):
        out_ref[0:1, r:r + 1, :] = out_ref[0:1, r:r + 1, :] + v


def fused_criterion_sums(logits_s, srcpack, tgtpack, tcls_col, qv_col,
                         *, alpha, gamma, tq):
    """Returns (L, 5) raw loss sums: [ce, ce_obj, bbox_l1, giou, inner]."""
    L, BQp, C = logits_s.shape
    nt = BQp // tq
    kern = functools.partial(_criterion_kernel,
                             alpha=float(alpha), gamma=float(gamma))
    out = pl.pallas_call(
        kern,
        out_shape=jax.ShapeDtypeStruct((L, 8, 128), jnp.float32),
        grid_spec=pltpu.PrefetchScalarGridSpec(
            num_scalar_prefetch=0,
            grid=(L, nt),                                # reduction axis last
            in_specs=[
                pl.BlockSpec((1, tq, C), lambda l, q: (l, q, 0)),   # logits (natural)
                pl.BlockSpec((1, 8, tq), lambda l, q: (l, 0, q)),   # box/point/obj pack
                pl.BlockSpec((8, tq), lambda l, q: (0, q)),         # target pack
                pl.BlockSpec((tq, 1), lambda l, q: (q, 0)),         # class-id column
                pl.BlockSpec((tq, 1), lambda l, q: (q, 0)),         # query-valid column
            ],
            out_specs=pl.BlockSpec((1, 8, 128), lambda l, q: (l, 0, 0)),
        ),
        compiler_params=pltpu.CompilerParams(
            dimension_semantics=("parallel", "arbitrary")),
    )(logits_s, srcpack, tgtpack, tcls_col, qv_col)
    return out[:, :5, 0]


# -----------------------------------------------------------------------------
# SetCriterion forward (JAX glue: layer stacking, query-aligned targets,
# class_error metric).
# -----------------------------------------------------------------------------
def set_criterion_forward(outputs, targets, *, num_classes, focal_alpha, losses,
                          tq_max=512):
    outputs_without_aux = {k: v for k, v in outputs.items() if k != 'aux_outputs'}
    layer_outputs = [outputs_without_aux] + list(outputs.get('aux_outputs', []))
    L = len(layer_outputs)
    B, Q, C = outputs['pred_logits'].shape
    BQ = B * Q

    # Query padding: tiles of TQ queries (lane- and sublane-aligned, masked).
    BQp = _round_up(BQ, 128)
    if BQp > tq_max and BQp % tq_max != 0:
        BQp = _round_up(BQ, tq_max)
    tq = min(tq_max, BQp)
    padq = BQp - BQ

    # TODO(synk): Hungarian matcher; identity matching (query i <-> target i),
    #             re-used for every decoder layer.
    n_per = [min(int(t['labels'].shape[0]), Q) for t in targets]
    num_boxes = float(max(sum(int(t['labels'].shape[0]) for t in targets), 1))
    # TODO(synk): distributed all-reduce of num_boxes across replicas.

    # Layer-independent, query-aligned targets (computed once, no scatters).
    qidx = jnp.arange(Q)
    tcls_rows, tbox_rows, mm_rows = [], [], []
    for t, n in zip(targets, n_per):
        lab = t['labels'][:n].astype(jnp.int32)
        box = t['boxes'][:n].astype(jnp.float32)
        tcls_rows.append(jnp.pad(lab, (0, Q - n), constant_values=num_classes))
        tbox_rows.append(jnp.pad(box, ((0, Q - n), (0, 0))))
        mm_rows.append((qidx < n).astype(jnp.float32))
    tcls = jnp.stack(tcls_rows).reshape(BQ)                       # (BQ,) int32
    tbox = jnp.stack(tbox_rows).reshape(BQ, 4)                    # (BQ, 4)
    mm = jnp.stack(mm_rows).reshape(BQ)                           # (BQ,)

    tcls_col = jnp.pad(tcls, (0, padq),
                       constant_values=num_classes).reshape(BQp, 1)
    qv_col = (jnp.arange(BQp) < BQ).astype(jnp.float32).reshape(BQp, 1)

    tgt_feat = jnp.concatenate(
        [tbox, mm[:, None], jnp.ones((BQ, 1), jnp.float32),
         jnp.zeros((BQ, 2), jnp.float32)], axis=1)                # (BQ, 8)
    tgtpack = jnp.pad(tgt_feat, ((0, padq), (0, 0))).T            # (8, BQp)

    def pack_layer(lo):
        f = jnp.concatenate(
            [lo['pred_boxes'].reshape(BQ, 4).astype(jnp.float32),
             lo['pred_points'].reshape(BQ, 2).astype(jnp.float32),
             lo['pred_objs'].reshape(BQ, 1).astype(jnp.float32),
             jnp.zeros((BQ, 1), jnp.float32)], axis=1)            # (BQ, 8)
        return jnp.pad(f, ((0, padq), (0, 0))).T                  # (8, BQp)

    srcpack = jnp.stack([pack_layer(lo) for lo in layer_outputs])  # (L, 8, BQp)

    # Logits: natural (queries, classes) layout, bf16 transfer, pad fused into
    # the stacking copy.  (No transpose of the big tensor.)
    zpad = jnp.zeros((padq, C), jnp.bfloat16)

    def logits_layer(lo):
        x = lo['pred_logits'].reshape(BQ, C).astype(jnp.bfloat16)
        return jnp.concatenate([x, zpad], axis=0) if padq else x

    logits_s = jnp.stack([logits_layer(lo) for lo in layer_outputs])  # (L, BQp, C)

    sums = fused_criterion_sums(
        logits_s, srcpack, tgtpack, tcls_col, qv_col,
        alpha=focal_alpha, gamma=2.0, tq=tq) / num_boxes              # (L, 5)

    names = ('loss_ce', 'loss_ce_obj', 'loss_bbox', 'loss_giou', 'loss_inner')
    want = {'loss_ce': 'labels' in losses,
            'loss_ce_obj': 'objs' in losses,
            'loss_bbox': 'boxes' in losses,
            'loss_giou': 'boxes' in losses,
            'loss_inner': 'inner' in losses}

    all_losses = {}
    for li in range(L):
        suffix = '' if li == 0 else f'_{li - 1}'
        for ci, name in enumerate(names):
            if want[name]:
                all_losses[name + suffix] = sums[li, ci]

    # class_error metric (top layer only, log=True), plain-JAX glue.
    if 'labels' in losses and sum(n_per) > 0:
        batch_idx = jnp.concatenate([jnp.full((n,), b, jnp.int32)
                                     for b, n in enumerate(n_per) if n > 0])
        src_idx = jnp.concatenate([jnp.arange(n, dtype=jnp.int32)
                                   for n in n_per if n > 0])
        labels_cat = jnp.concatenate([t['labels'][:n].astype(jnp.int32)
                                      for t, n in zip(targets, n_per) if n > 0])
        matched_logits = outputs['pred_logits'][batch_idx, src_idx]
        pred = jnp.argmax(matched_logits, axis=-1)
        acc = 100.0 * jnp.mean((pred == labels_cat).astype(jnp.float32))
        all_losses['class_error'] = 100.0 - acc

    # TODO(synk): loss_masks not implemented.
    return all_losses


# -----------------------------------------------------------------------------
if __name__ == "__main__":
    key = jax.random.PRNGKey(0)
    B, Q, num_classes = 2, 8, 32
    focal_alpha = 0.25
    losses = ['labels', 'boxes', 'objs', 'inner']

    ks = jax.random.split(key, 12)

    def make_preds(k0, k1, k2, k3):
        pred_logits = jax.random.normal(k0, (B, Q, num_classes), jnp.float32)
        kc, kw = jax.random.split(k1)
        cxcy = jax.random.uniform(kc, (B, Q, 2), minval=0.3, maxval=0.7)
        wh = jax.random.uniform(kw, (B, Q, 2), minval=0.1, maxval=0.3)
        pred_boxes = jnp.concatenate([cxcy, wh], axis=-1)
        pred_points = jax.random.uniform(k2, (B, Q, 2), minval=0.2, maxval=0.8)
        pred_objs = jax.random.normal(k3, (B, Q, 1), jnp.float32)
        return {'pred_logits': pred_logits, 'pred_boxes': pred_boxes,
                'pred_points': pred_points, 'pred_objs': pred_objs}

    outputs = make_preds(ks[0], ks[1], ks[2], ks[3])
    outputs['aux_outputs'] = [make_preds(ks[4], ks[5], ks[6], ks[7])]

    # targets: batch 0 has 3 boxes, batch 1 has 2 boxes
    n_per_batch = [3, 2]
    targets = []
    for bi, n in enumerate(n_per_batch):
        kb = jax.random.fold_in(ks[8], bi)
        kl = jax.random.fold_in(ks[9], bi)
        cxcy = jax.random.uniform(kb, (n, 2), minval=0.3, maxval=0.7)
        wh = jax.random.uniform(jax.random.fold_in(kb, 1), (n, 2),
                                minval=0.1, maxval=0.3)
        boxes = jnp.concatenate([cxcy, wh], axis=-1)
        labels = jax.random.randint(kl, (n,), 0, num_classes)
        targets.append({'boxes': boxes, 'labels': labels})

    result = set_criterion_forward(
        outputs, targets,
        num_classes=num_classes, focal_alpha=focal_alpha, losses=losses)
    result = jax.block_until_ready(result)

    ok = True
    for k in sorted(result.keys()):
        v = float(result[k])
        ok = ok and (v == v) and abs(v) != float('inf')
    assert ok, "non-finite loss value"
    print("KERNEL_OK")
</pallas_src>

<mosaic_0001>
module attributes {stable_mosaic.version = 11 : i64} {
  func.func @_criterion_kernel(%arg0: i32, %arg1: i32, %arg2: memref<1x128x32xbf16, #tpu.memory_space<vmem>>, %arg3: memref<1x8x128xf32, #tpu.memory_space<vmem>>, %arg4: memref<8x128xf32, #tpu.memory_space<vmem>>, %arg5: memref<128x1xi32, #tpu.memory_space<vmem>>, %arg6: memref<128x1xf32, #tpu.memory_space<vmem>>, %arg7: memref<1x8x128xf32, #tpu.memory_space<vmem>>) attributes {dimension_semantics = [#tpu.dimension_semantics<parallel>, #tpu.dimension_semantics<arbitrary>], iteration_bounds = array<i64: 2, 1>, scalar_prefetch = 0 : i64, scratch_operands = 0 : i64, tpu.core_type = #tpu.core_type<tc>, window_params = [{transform_indices = @transform_0, window_bounds = array<i64: 1, 128, 32>}, {transform_indices = @transform_1, window_bounds = array<i64: 1, 8, 128>}, {transform_indices = @transform_2, window_bounds = array<i64: 8, 128>}, {transform_indices = @transform_3, window_bounds = array<i64: 128, 1>}, {transform_indices = @transform_4, window_bounds = array<i64: 128, 1>}, {transform_indices = @transform_5, window_bounds = array<i64: 1, 8, 128>}]} {
    %c0_i32 = arith.constant 0 : i32
    %0 = arith.cmpi eq, %arg1, %c0_i32 : i32
    %1 = arith.extui %0 : i1 to i32
    %c0_i32_0 = arith.constant 0 : i32
    %2 = arith.cmpi ne, %1, %c0_i32_0 : i32
    scf.if %2 {
      %cst_78 = arith.constant 0.000000e+00 : f32
      %221 = vector.broadcast %cst_78 : f32 to vector<1x8x128xf32>
      %c0_79 = arith.constant 0 : index
      %c0_80 = arith.constant 0 : index
      %c0_81 = arith.constant 0 : index
      %222 = vector.load %arg7[%c0_79, %c0_80, %c0_81] : memref<1x8x128xf32, #tpu.memory_space<vmem>>, vector<1x8x128xf32>
      tpu.vector_store %arg7[%c0_79, %c0_80, %c0_81], %221 {strides = array<i32>} : memref<1x8x128xf32, #tpu.memory_space<vmem>>, vector<1x8x128xf32>,
    } else {
    }
    %c0 = arith.constant 0 : index
    %c0_1 = arith.constant 0 : index
    %c0_2 = arith.constant 0 : index
    %3 = vector.load %arg2[%c0, %c0_1, %c0_2] : memref<1x128x32xbf16, #tpu.memory_space<vmem>>, vector<1x128x32xbf16>
    %4 = vector.shape_cast %3 : vector<1x128x32xbf16> to vector<128x32xbf16>
    %5 = arith.extf %4 : vector<128x32xbf16> to vector<128x32xf32>
    %c0_3 = arith.constant 0 : index
    %c0_4 = arith.constant 0 : index
    %6 = vector.load %arg5[%c0_3, %c0_4] : memref<128x1xi32, #tpu.memory_space<vmem>>, vector<128x1xi32>
    %c0_5 = arith.constant 0 : index
    %c0_6 = arith.constant 0 : index
    %7 = vector.load %arg6[%c0_5, %c0_6] : memref<128x1xf32, #tpu.memory_space<vmem>>, vector<128x1xf32>
    %8 = tpu.iota {dimensions = array<i32: 1>} : vector<128x32xi32>
    %9 = vector.broadcast %6 : vector<128x1xi32> to vector<128x32xi32>
    %10 = arith.cmpi eq, %8, %9 : vector<128x32xi32>
    %11 = arith.extui %10 : vector<128x32xi1> to vector<128x32xi32>
    %12 = arith.sitofp %11 : vector<128x32xi32> to vector<128x32xf32>
    %13 = math.absf %5 : vector<128x32xf32>
    %cst = arith.constant 0.000000e+00 : f32
    %14 = vector.broadcast %cst : f32 to vector<128x32xf32>
    %15 = arith.subf %14, %13 : vector<128x32xf32>
    %16 = math.exp %15 : vector<128x32xf32>
    %cst_7 = arith.constant 1.000000e+00 : f32
    %17 = vector.broadcast %cst_7 : f32 to vector<128x32xf32>
    %18 = arith.addf %17, %16 : vector<128x32xf32>
    %19 = tpu.reciprocal %18 {approx = true} : vector<128x32xf32> -> vector<128x32xf32>
    %cst_8 = arith.constant 0.000000e+00 : f32
    %20 = vector.broadcast %cst_8 : f32 to vector<128x32xf32>
    %21 = arith.cmpf oge, %5, %20 : vector<128x32xf32>
    %22 = arith.mulf %16, %19 : vector<128x32xf32>
    %23 = arith.select %21, %19, %22 : vector<128x32xi1>, vector<128x32xf32>
    %cst_9 = arith.constant 0.000000e+00 : f32
    %24 = vector.broadcast %cst_9 : f32 to vector<128x32xf32>
    %25 = arith.maximumf %5, %24 : vector<128x32xf32>
    %26 = arith.mulf %5, %12 : vector<128x32xf32>
    %27 = arith.subf %25, %26 : vector<128x32xf32>
    %28 = math.log1p %16 : vector<128x32xf32>
    %29 = arith.addf %27, %28 : vector<128x32xf32>
    %30 = arith.mulf %23, %12 : vector<128x32xf32>
    %cst_10 = arith.constant 1.000000e+00 : f32
    %31 = vector.broadcast %cst_10 : f32 to vector<128x32xf32>
    %32 = arith.subf %31, %23 : vector<128x32xf32>
    %cst_11 = arith.constant 1.000000e+00 : f32
    %33 = vector.broadcast %cst_11 : f32 to vector<128x32xf32>
    %34 = arith.subf %33, %12 : vector<128x32xf32>
    %35 = arith.mulf %32, %34 : vector<128x32xf32>
    %36 = arith.addf %30, %35 : vector<128x32xf32>
    %cst_12 = arith.constant 1.000000e+00 : f32
    %37 = vector.broadcast %cst_12 : f32 to vector<128x32xf32>
    %38 = arith.subf %37, %36 : vector<128x32xf32>
    %39 = arith.mulf %38, %38 : vector<128x32xf32>
    %cst_13 = arith.constant 2.500000e-01 : f32
    %cst_14 = arith.constant 7.500000e-01 : f32
    %40 = vector.broadcast %cst_13 : f32 to vector<128x32xf32>
    %41 = vector.broadcast %cst_14 : f32 to vector<128x32xf32>
    %42 = arith.select %10, %40, %41 : vector<128x32xi1>, vector<128x32xf32>
    %43 = vector.broadcast %7 : vector<128x1xf32> to vector<128x32xf32>
    %44 = arith.mulf %42, %43 : vector<128x32xf32>
    %45 = arith.mulf %29, %39 : vector<128x32xf32>
    %46 = arith.mulf %45, %44 : vector<128x32xf32>
    %47 = vector.shape_cast %46 : vector<128x32xf32> to vector<1x128x32xf32>
    %cst_15 = arith.constant dense<0.000000e+00> : vector<1xf32>
    %48 = vector.multi_reduction <add>, %47, %cst_15 [1, 2] : vector<1x128x32xf32> to vector<1xf32>
    %49 = vector.shape_cast %48 : vector<1xf32> to vector<1x1x1xf32>
    %50 = vector.extract %49[0, 0, 0] : f32 from vector<1x1x1xf32>
    %c0_16 = arith.constant 0 : index
    %c0_17 = arith.constant 0 : index
    %c0_18 = arith.constant 0 : index
    %51 = vector.load %arg3[%c0_16, %c0_17, %c0_18] : memref<1x8x128xf32, #tpu.memory_space<vmem>>, vector<1x8x128xf32>
    %52 = vector.shape_cast %51 : vector<1x8x128xf32> to vector<8x128xf32>
    %c0_19 = arith.constant 0 : index
    %c0_20 = arith.constant 0 : index
    %53 = vector.load %arg4[%c0_19, %c0_20] : memref<8x128xf32, #tpu.memory_space<vmem>>, vector<8x128xf32>
    %54 = vector.extract_strided_slice %52 {offsets = [0, 0], sizes = [2, 128], strides = [1, 1]} : vector<8x128xf32> to vector<2x128xf32>
    %55 = vector.extract_strided_slice %52 {offsets = [2, 0], sizes = [2, 128], strides = [1, 1]} : vector<8x128xf32> to vector<2x128xf32>
    %cst_21 = arith.constant 5.000000e-01 : f32
    %56 = vector.broadcast %cst_21 : f32 to vector<2x128xf32>
    %57 = arith.mulf %56, %55 : vector<2x128xf32>
    %58 = arith.subf %54, %57 : vector<2x128xf32>
    %59 = vector.extract_strided_slice %52 {offsets = [0, 0], sizes = [2, 128], strides = [1, 1]} : vector<8x128xf32> to vector<2x128xf32>
    %60 = vector.extract_strided_slice %52 {offsets = [2, 0], sizes = [2, 128], strides = [1, 1]} : vector<8x128xf32> to vector<2x128xf32>
    %cst_22 = arith.constant 5.000000e-01 : f32
    %61 = vector.broadcast %cst_22 : f32 to vector<2x128xf32>
    %62 = arith.mulf %61, %60 : vector<2x128xf32>
    %63 = arith.addf %59, %62 : vector<2x128xf32>
    %64 = vector.extract_strided_slice %53 {offsets = [0, 0], sizes = [2, 128], strides = [1, 1]} : vector<8x128xf32> to vector<2x128xf32>
    %65 = vector.extract_strided_slice %53 {offsets = [2, 0], sizes = [2, 128], strides = [1, 1]} : vector<8x128xf32> to vector<2x128xf32>
    %cst_23 = arith.constant 5.000000e-01 : f32
    %66 = vector.broadcast %cst_23 : f32 to vector<2x128xf32>
    %67 = arith.mulf %66, %65 : vector<2x128xf32>
    %68 = arith.subf %64, %67 : vector<2x128xf32>
    %69 = vector.extract_strided_slice %53 {offsets = [0, 0], sizes = [2, 128], strides = [1, 1]} : vector<8x128xf32> to vector<2x128xf32>
    %70 = vector.extract_strided_slice %53 {offsets = [2, 0], sizes = [2, 128], strides = [1, 1]} : vector<8x128xf32> to vector<2x128xf32>
    %cst_24 = arith.constant 5.000000e-01 : f32
    %71 = vector.broadcast %cst_24 : f32 to vector<2x128xf32>
    %72 = arith.mulf %71, %70 : vector<2x128xf32>
    %73 = arith.addf %69, %72 : vector<2x128xf32>
    %74 = vector.extract_strided_slice %52 {offsets = [4, 0], sizes = [2, 128], strides = [1, 1]} : vector<8x128xf32> to vector<2x128xf32>
    %75 = vector.extract_strided_slice %52 {offsets = [6, 0], sizes = [1, 128], strides = [1, 1]} : vector<8x128xf32> to vector<1x128xf32>
    %76 = vector.extract_strided_slice %53 {offsets = [4, 0], sizes = [1, 128], strides = [1, 1]} : vector<8x128xf32> to vector<1x128xf32>
    %77 = vector.extract_strided_slice %53 {offsets = [5, 0], sizes = [1, 128], strides = [1, 1]} : vector<8x128xf32> to vector<1x128xf32>
    %78 = arith.subf %58, %68 : vector<2x128xf32>
    %79 = math.absf %78 : vector<2x128xf32>
    %80 = arith.subf %63, %73 : vector<2x128xf32>
    %81 = math.absf %80 : vector<2x128xf32>
    %82 = arith.addf %79, %81 : vector<2x128xf32>
    %83 = vector.broadcast %76 : vector<1x128xf32> to vector<2x128xf32>
    %84 = arith.mulf %82, %83 : vector<2x128xf32>
    %85 = vector.shape_cast %84 : vector<2x128xf32> to vector<1x2x128xf32>
    %cst_25 = arith.constant dense<0.000000e+00> : vector<1xf32>
    %86 = vector.multi_reduction <add>, %85, %cst_25 [1, 2] : vector<1x2x128xf32> to vector<1xf32>
    %87 = vector.shape_cast %86 : vector<1xf32> to vector<1x1x1xf32>
    %88 = vector.extract %87[0, 0, 0] : f32 from vector<1x1x1xf32>
    %89 = arith.minimumf %63, %73 : vector<2x128xf32>
    %90 = arith.maximumf %58, %68 : vector<2x128xf32>
    %91 = arith.subf %89, %90 : vector<2x128xf32>
    %cst_26 = arith.constant 0.000000e+00 : f32
    %92 = vector.broadcast %cst_26 : f32 to vector<2x128xf32>
    %93 = arith.maximumf %91, %92 : vector<2x128xf32>
    %94 = vector.extract_strided_slice %93 {offsets = [0, 0], sizes = [1, 128], strides = [1, 1]} : vector<2x128xf32> to vector<1x128xf32>
    %95 = vector.extract_strided_slice %93 {offsets = [1, 0], sizes = [1, 128], strides = [1, 1]} : vector<2x128xf32> to vector<1x128xf32>
    %96 = arith.mulf %94, %95 : vector<1x128xf32>
    %97 = arith.subf %63, %58 : vector<2x128xf32>
    %98 = arith.subf %73, %68 : vector<2x128xf32>
    %99 = vector.extract_strided_slice %97 {offsets = [0, 0], sizes = [1, 128], strides = [1, 1]} : vector<2x128xf32> to vector<1x128xf32>
    %100 = vector.extract_strided_slice %97 {offsets = [1, 0], sizes = [1, 128], strides = [1, 1]} : vector<2x128xf32> to vector<1x128xf32>
    %101 = arith.mulf %99, %100 : vector<1x128xf32>
    %102 = vector.extract_strided_slice %98 {offsets = [0, 0], sizes = [1, 128], strides = [1, 1]} : vector<2x128xf32> to vector<1x128xf32>
    %103 = vector.extract_strided_slice %98 {offsets = [1, 0], sizes = [1, 128], strides = [1, 1]} : vector<2x128xf32> to vector<1x128xf32>
    %104 = arith.mulf %102, %103 : vector<1x128xf32>
    %105 = arith.addf %101, %104 : vector<1x128xf32>
    %106 = arith.subf %105, %96 : vector<1x128xf32>
    %cst_27 = arith.constant 0.000000e+00 : f32
    %107 = vector.broadcast %cst_27 : f32 to vector<1x128xf32>
    %108 = arith.cmpf ogt, %106, %107 : vector<1x128xf32>
    %cst_28 = arith.constant 0.000000e+00 : f32
    %109 = vector.broadcast %cst_28 : f32 to vector<1x128xf32>
    %110 = arith.cmpf ogt, %106, %109 : vector<1x128xf32>
    %cst_29 = arith.constant 1.000000e+00 : f32
    %111 = vector.broadcast %cst_29 : f32 to vector<1x128xf32>
    %112 = arith.select %110, %106, %111 : vector<1x128xi1>, vector<1x128xf32>
    %113 = arith.divf %96, %112 : vector<1x128xf32>
    %cst_30 = arith.constant 0.000000e+00 : f32
    %114 = vector.broadcast %cst_30 : f32 to vector<1x128xf32>
    %115 = arith.select %108, %113, %114 : vector<1x128xi1>, vector<1x128xf32>
    %116 = arith.maximumf %63, %73 : vector<2x128xf32>
    %117 = arith.minimumf %58, %68 : vector<2x128xf32>
    %118 = arith.subf %116, %117 : vector<2x128xf32>
    %cst_31 = arith.constant 0.000000e+00 : f32
    %119 = vector.broadcast %cst_31 : f32 to vector<2x128xf32>
    %120 = arith.maximumf %118, %119 : vector<2x128xf32>
    %121 = vector.extract_strided_slice %120 {offsets = [0, 0], sizes = [1, 128], strides = [1, 1]} : vector<2x128xf32> to vector<1x128xf32>
    %122 = vector.extract_strided_slice %120 {offsets = [1, 0], sizes = [1, 128], strides = [1, 1]} : vector<2x128xf32> to vector<1x128xf32>
    %123 = arith.mulf %121, %122 : vector<1x128xf32>
    %cst_32 = arith.constant 0.000000e+00 : f32
    %124 = vector.broadcast %cst_32 : f32 to vector<1x128xf32>
    %125 = arith.cmpf ogt, %123, %124 : vector<1x128xf32>
    %126 = arith.subf %123, %106 : vector<1x128xf32>
    %cst_33 = arith.constant 0.000000e+00 : f32
    %127 = vector.broadcast %cst_33 : f32 to vector<1x128xf32>
    %128 = arith.cmpf ogt, %123, %127 : vector<1x128xf32>
    %cst_34 = arith.constant 1.000000e+00 : f32
    %129 = vector.broadcast %cst_34 : f32 to vector<1x128xf32>
    %130 = arith.select %128, %123, %129 : vector<1x128xi1>, vector<1x128xf32>
    %131 = arith.divf %126, %130 : vector<1x128xf32>
    %cst_35 = arith.constant 0.000000e+00 : f32
    %132 = vector.broadcast %cst_35 : f32 to vector<1x128xf32>
    %133 = arith.select %125, %131, %132 : vector<1x128xi1>, vector<1x128xf32>
    %134 = arith.subf %115, %133 : vector<1x128xf32>
    %cst_36 = arith.constant 1.000000e+00 : f32
    %135 = vector.broadcast %cst_36 : f32 to vector<1x128xf32>
    %136 = arith.subf %135, %134 : vector<1x128xf32>
    %137 = arith.mulf %136, %76 : vector<1x128xf32>
    %138 = vector.shape_cast %137 : vector<1x128xf32> to vector<1x1x128xf32>
    %cst_37 = arith.constant dense<0.000000e+00> : vector<1xf32>
    %139 = vector.multi_reduction <add>, %138, %cst_37 [1, 2] : vector<1x1x128xf32> to vector<1xf32>
    %140 = vector.shape_cast %139 : vector<1xf32> to vector<1x1x1xf32>
    %141 = vector.extract %140[0, 0, 0] : f32 from vector<1x1x1xf32>
    %142 = arith.subf %74, %68 : vector<2x128xf32>
    %143 = arith.subf %73, %74 : vector<2x128xf32>
    %144 = arith.minimumf %142, %143 : vector<2x128xf32>
    %145 = vector.extract_strided_slice %144 {offsets = [0, 0], sizes = [1, 128], strides = [1, 1]} : vector<2x128xf32> to vector<1x128xf32>
    %146 = vector.extract_strided_slice %144 {offsets = [1, 0], sizes = [1, 128], strides = [1, 1]} : vector<2x128xf32> to vector<1x128xf32>
    %147 = arith.minimumf %145, %146 : vector<1x128xf32>
    %cst_38 = arith.constant 0.000000e+00 : f32
    %148 = vector.broadcast %cst_38 : f32 to vector<1x128xf32>
    %149 = arith.cmpf oge, %147, %148 : vector<1x128xf32>
    %150 = arith.extui %149 : vector<1x128xi1> to vector<1x128xi32>
    %151 = arith.sitofp %150 : vector<1x128xi32> to vector<1x128xf32>
    %cst_39 = arith.constant 1.000000e+00 : f32
    %152 = vector.broadcast %cst_39 : f32 to vector<1x128xf32>
    %153 = arith.subf %152, %151 : vector<1x128xf32>
    %154 = arith.mulf %153, %76 : vector<1x128xf32>
    %155 = vector.shape_cast %154 : vector<1x128xf32> to vector<1x1x128xf32>
    %cst_40 = arith.constant dense<0.000000e+00> : vector<1xf32>
    %156 = vector.multi_reduction <add>, %155, %cst_40 [1, 2] : vector<1x1x128xf32> to vector<1xf32>
    %157 = vector.shape_cast %156 : vector<1xf32> to vector<1x1x1xf32>
    %158 = vector.extract %157[0, 0, 0] : f32 from vector<1x1x1xf32>
    %159 = arith.mulf %115, %76 : vector<1x128xf32>
    %160 = math.absf %75 : vector<1x128xf32>
    %cst_41 = arith.constant 0.000000e+00 : f32
    %161 = vector.broadcast %cst_41 : f32 to vector<1x128xf32>
    %162 = arith.subf %161, %160 : vector<1x128xf32>
    %163 = math.exp %162 : vector<1x128xf32>
    %cst_42 = arith.constant 1.000000e+00 : f32
    %164 = vector.broadcast %cst_42 : f32 to vector<1x128xf32>
    %165 = arith.addf %164, %163 : vector<1x128xf32>
    %166 = tpu.reciprocal %165 {approx = true} : vector<1x128xf32> -> vector<1x128xf32>
    %cst_43 = arith.constant 0.000000e+00 : f32
    %167 = vector.broadcast %cst_43 : f32 to vector<1x128xf32>
    %168 = arith.cmpf oge, %75, %167 : vector<1x128xf32>
    %169 = arith.mulf %163, %166 : vector<1x128xf32>
    %170 = arith.select %168, %166, %169 : vector<1x128xi1>, vector<1x128xf32>
    %cst_44 = arith.constant 0.000000e+00 : f32
    %171 = vector.broadcast %cst_44 : f32 to vector<1x128xf32>
    %172 = arith.maximumf %75, %171 : vector<1x128xf32>
    %173 = arith.mulf %75, %159 : vector<1x128xf32>
    %174 = arith.subf %172, %173 : vector<1x128xf32>
    %175 = math.log1p %163 : vector<1x128xf32>
    %176 = arith.addf %174, %175 : vector<1x128xf32>
    %177 = arith.mulf %170, %159 : vector<1x128xf32>
    %cst_45 = arith.constant 1.000000e+00 : f32
    %178 = vector.broadcast %cst_45 : f32 to vector<1x128xf32>
    %179 = arith.subf %178, %170 : vector<1x128xf32>
    %cst_46 = arith.constant 1.000000e+00 : f32
    %180 = vector.broadcast %cst_46 : f32 to vector<1x128xf32>
    %181 = arith.subf %180, %159 : vector<1x128xf32>
    %182 = arith.mulf %179, %181 : vector<1x128xf32>
    %183 = arith.addf %177, %182 : vector<1x128xf32>
    %cst_47 = arith.constant 1.000000e+00 : f32
    %184 = vector.broadcast %cst_47 : f32 to vector<1x128xf32>
    %185 = arith.subf %184, %183 : vector<1x128xf32>
    %186 = arith.mulf %185, %185 : vector<1x128xf32>
    %187 = arith.mulf %176, %186 : vector<1x128xf32>
    %cst_48 = arith.constant 2.500000e-01 : f32
    %188 = vector.broadcast %cst_48 : f32 to vector<1x128xf32>
    %189 = arith.mulf %188, %159 : vector<1x128xf32>
    %cst_49 = arith.constant 1.000000e+00 : f32
    %190 = vector.broadcast %cst_49 : f32 to vector<1x128xf32>
    %191 = arith.subf %190, %159 : vector<1x128xf32>
    %cst_50 = arith.constant 7.500000e-01 : f32
    %192 = vector.broadcast %cst_50 : f32 to vector<1x128xf32>
    %193 = arith.mulf %192, %191 : vector<1x128xf32>
    %194 = arith.addf %189, %193 : vector<1x128xf32>
    %195 = arith.mulf %194, %187 : vector<1x128xf32>
    %196 = arith.mulf %195, %77 : vector<1x128xf32>
    %197 = vector.shape_cast %196 : vector<1x128xf32> to vector<1x1x128xf32>
    %cst_51 = arith.constant dense<0.000000e+00> : vector<1xf32>
    %198 = vector.multi_reduction <add>, %197, %cst_51 [1, 2] : vector<1x1x128xf32> to vector<1xf32>
    %199 = vector.shape_cast %198 : vector<1xf32> to vector<1x1x1xf32>
    %200 = vector.extract %199[0, 0, 0] : f32 from vector<1x1x1xf32>
    %c0_52 = arith.constant 0 : index
    %c0_53 = arith.constant 0 : index
    %c0_54 = arith.constant 0 : index
    %201 = vector.load %arg7[%c0_52, %c0_53, %c0_54] : memref<1x8x128xf32, #tpu.memory_space<vmem>>, vector<1x1x128xf32>
    %202 = vector.broadcast %50 : f32 to vector<1x1x128xf32>
    %203 = arith.addf %201, %202 : vector<1x1x128xf32>
    %c0_55 = arith.constant 0 : index
    %c0_56 = arith.constant 0 : index
    %c0_57 = arith.constant 0 : index
    %204 = vector.load %arg7[%c0_55, %c0_56, %c0_57] : memref<1x8x128xf32, #tpu.memory_space<vmem>>, vector<1x1x128xf32>
    tpu.vector_store %arg7[%c0_55, %c0_56, %c0_57], %203 {strides = array<i32>} : memref<1x8x128xf32, #tpu.memory_space<vmem>>, vector<1x1x128xf32>,
    %c0_58 = arith.constant 0 : index
    %c1 = arith.constant 1 : index
    %c0_59 = arith.constant 0 : index
    %205 = vector.load %arg7[%c0_58, %c1, %c0_59] : memref<1x8x128xf32, #tpu.memory_space<vmem>>, vector<1x1x128xf32>
    %206 = vector.broadcast %200 : f32 to vector<1x1x128xf32>
    %207 = arith.addf %205, %206 : vector<1x1x128xf32>
    %c0_60 = arith.constant 0 : index
    %c1_61 = arith.constant 1 : index
    %c0_62 = arith.constant 0 : index
    %208 = vector.load %arg7[%c0_60, %c1_61, %c0_62] : memref<1x8x128xf32, #tpu.memory_space<vmem>>, vector<1x1x128xf32>
    tpu.vector_store %arg7[%c0_60, %c1_61, %c0_62], %207 {strides = array<i32>} : memref<1x8x128xf32, #tpu.memory_space<vmem>>, vector<1x1x128xf32>,
    %c0_63 = arith.constant 0 : index
    %c2 = arith.constant 2 : index
    %c0_64 = arith.constant 0 : index
    %209 = vector.load %arg7[%c0_63, %c2, %c0_64] : memref<1x8x128xf32, #tpu.memory_space<vmem>>, vector<1x1x128xf32>
    %210 = vector.broadcast %88 : f32 to vector<1x1x128xf32>
    %211 = arith.addf %209, %210 : vector<1x1x128xf32>
    %c0_65 = arith.constant 0 : index
    %c2_66 = arith.constant 2 : index
    %c0_67 = arith.constant 0 : index
    %212 = vector.load %arg7[%c0_65, %c2_66, %c0_67] : memref<1x8x128xf32, #tpu.memory_space<vmem>>, vector<1x1x128xf32>
    tpu.vector_store %arg7[%c0_65, %c2_66, %c0_67], %211 {strides = array<i32>} : memref<1x8x128xf32, #tpu.memory_space<vmem>>, vector<1x1x128xf32>,
    %c0_68 = arith.constant 0 : index
    %c3 = arith.constant 3 : index
    %c0_69 = arith.constant 0 : index
    %213 = vector.load %arg7[%c0_68, %c3, %c0_69] : memref<1x8x128xf32, #tpu.memory_space<vmem>>, vector<1x1x128xf32>
    %214 = vector.broadcast %141 : f32 to vector<1x1x128xf32>
    %215 = arith.addf %213, %214 : vector<1x1x128xf32>
    %c0_70 = arith.constant 0 : index
    %c3_71 = arith.constant 3 : index
    %c0_72 = arith.constant 0 : index
    %216 = vector.load %arg7[%c0_70, %c3_71, %c0_72] : memref<1x8x128xf32, #tpu.memory_space<vmem>>, vector<1x1x128xf32>
    tpu.vector_store %arg7[%c0_70, %c3_71, %c0_72], %215 {strides = array<i32>} : memref<1x8x128xf32, #tpu.memory_space<vmem>>, vector<1x1x128xf32>,
    %c0_73 = arith.constant 0 : index
    %c4 = arith.constant 4 : index
    %c0_74 = arith.constant 0 : index
    %217 = vector.load %arg7[%c0_73, %c4, %c0_74] : memref<1x8x128xf32, #tpu.memory_space<vmem>>, vector<1x1x128xf32>
    %218 = vector.broadcast %158 : f32 to vector<1x1x128xf32>
    %219 = arith.addf %217, %218 : vector<1x1x128xf32>
    %c0_75 = arith.constant 0 : index
    %c4_76 = arith.constant 4 : index
    %c0_77 = arith.constant 0 : index
    %220 = vector.load %arg7[%c0_75, %c4_76, %c0_77] : memref<1x8x128xf32, #tpu.memory_space<vmem>>, vector<1x1x128xf32>
    tpu.vector_store %arg7[%c0_75, %c4_76, %c0_77], %219 {strides = array<i32>} : memref<1x8x128xf32, #tpu.memory_space<vmem>>, vector<1x1x128xf32>,
    return
  }
  func.func @transform_0(%arg0: i32, %arg1: i32) -> (i32, i32, i32) {
    %c0_i32 = arith.constant 0 : i32
    %c0_i32_0 = arith.constant 0 : i32
    return %arg0, %arg1, %c0_i32 : i32, i32, i32
  }
  func.func @transform_1(%arg0: i32, %arg1: i32) -> (i32, i32, i32) {
    %c0_i32 = arith.constant 0 : i32
    %c0_i32_0 = arith.constant 0 : i32
    return %arg0, %c0_i32, %arg1 : i32, i32, i32
  }
  func.func @transform_2(%arg0: i32, %arg1: i32) -> (i32, i32) {
    %c0_i32 = arith.constant 0 : i32
    %c0_i32_0 = arith.constant 0 : i32
    return %c0_i32, %arg1 : i32, i32
  }
  func.func @transform_3(%arg0: i32, %arg1: i32) -> (i32, i32) {
    %c0_i32 = arith.constant 0 : i32
    %c0_i32_0 = arith.constant 0 : i32
    return %arg1, %c0_i32 : i32, i32
  }
  func.func @transform_4(%arg0: i32, %arg1: i32) -> (i32, i32) {
    %c0_i32 = arith.constant 0 : i32
    %c0_i32_0 = arith.constant 0 : i32
    return %arg1, %c0_i32 : i32, i32
  }
  func.func @transform_5(%arg0: i32, %arg1: i32) -> (i32, i32, i32) {
    %c0_i32 = arith.constant 0 : i32
    %c0_i32_0 = arith.constant 0 : i32
    %c0_i32_1 = arith.constant 0 : i32
    return %arg0, %c0_i32, %c0_i32_0 : i32, i32, i32
  }
}

</mosaic_0001>

<llo_original>
// kernel: tpu_custom_call.1
$region0: #{tpu_custom_call.1}
  #allocation0 [shape = 'u32[]', space=smem, size = 0x4, offset = 0x4, fixed_abs, tag = 'smem constant byte address 0x4 - core index']
  #allocation1 [shape = 'u32[72,128]{1,0:T(1,128)}', space=vmem, size = 0x9000, scoped, tag = 'internal scratch']
  %s0 = inlined_call_operand.vmem [shape: bf16[2,128,32], index: 0, kind: input, shape index: {}]
  %s1 = inlined_call_operand.vmem [shape: f32[2,8,128], index: 1, kind: input, shape index: {}]
  %s2 = inlined_call_operand.vmem [shape: f32[8,128], index: 2, kind: input, shape index: {}]
  %s3 = inlined_call_operand.vmem [shape: s32[128,1], index: 3, kind: input, shape index: {}]
  %s4 = inlined_call_operand.vmem [shape: f32[128,1], index: 4, kind: input, shape index: {}]
  %s5 = inlined_call_operand.hbm [shape: f32[2,8,128], index: 5, kind: output, shape index: {}]
  %s6 = sld [smem:[#allocation0]]
  $region57: #{tpu_custom_call.1} parent=0
    _
  %s8 = ssub.s32 1, %s6
  %s9 = scalar_select 0, %s8, %s6
  $region1: #{tpu_custom_call.1} parent=0
    #allocation2 [shape = 'u8[8192]{0}', space=vmem, size = 0x2000, scoped, tag = 'output window, operand 0']
    #allocation3 [shape = 's32[2]{0}', space=sflag, size = 0x8, scoped, tag = 'scoped memory for tpu_custom_call.1']
    %10 = vsyncpa [#allocation3], 0
    %s11 = scalar_lea.sflag [#allocation3], 1
    %12 = vsyncpa %s11, 0
    loop: start=0, step=1, limit=4
    $region2: #{tpu_custom_call.1} parent=1 // loop_pre_header
      _
    $region3: #{tpu_custom_call.1} parent=1 // loop_header
      %s14 = sphi 0, %s18
      %p15 = scmp.ge.s32.totalorder %s14, 4
      %s21 = sphi 0, %s33
      %s22 = sphi 0, %s29
      %s23 = sphi 0, %s21
      %s24 = sphi 0, %s22
      %s25 = sphi 0, %s23
      %s26 = sphi 0, %s24
      %s38 = sphi 0, %s40
      %s41 = sphi 0, %s38
      %s42 = sphi 0, %s41
      %s58 = sphi 0, %s42
      %s66 = sphi 0, %s68
      %s69 = sphi 0, %s66
      %s70 = sphi 0, %s69
      %s86 = sphi 0, %s70
      %s92 = sphi 0, %s94
      %s95 = sphi 0, %s92
      %s96 = sphi 0, %s95
      %s112 = sphi 0, %s96
      %s118 = sphi 0, %s120
      %s121 = sphi 0, %s118
      %s122 = sphi 0, %s121
      %s138 = sphi 0, %s122
      %s144 = sphi 0, %s146
      %s147 = sphi 0, %s144
      %s148 = sphi 0, %s147
      %s164 = sphi 0, %s148
      %s170 = sphi 0, %s172
      %s173 = sphi 0, %s170
      %s174 = sphi 0, %s173
      %s190 = sphi 0, %s174
    $region4: #{tpu_custom_call.1} parent=1 // loop_header_branch
      %17 = sbr.rel (%p15) target = $region8
    $region5: #{tpu_custom_call.1} parent=1 // loop_body
      %s19 = ssub.s32 %s14, 1
      %s20 = ssub.s32 %s14, 2
      %s27 = sadd.s32 1, %s22
      %p28 = scmp.ge.s32.totalorder %s27, 1
      %s29 = scalar_select %p28, 0, %s27
      %s30 = sadd.s32 1, %s21
      %s31 = scalar_select %p28, %s30, %s21
      %p32 = scmp.ge.s32.totalorder %s31, 2
      %s33 = scalar_select %p32, 0, %s31
      %s34 = ssub.s32 %s21, %s33
      %s35 = ssub.s32 %s22, %s29
      %s36 = sor.u32 %s34, %s35
      %p37 = scmp.eq.s32.totalorder %s36, 0
      %s39 = sadd.s32 %s38, 1
      %s40 = scalar_select %p37, %s38, %s39
      %p43 = pneg %p37
      %p44 = scmp.eq.s32.totalorder %s14, 1
      %p45 = por %p43, %p44
      %p46 = scmp.ne.s32.totalorder %s38, %s41
      %p47 = scmp.eq.s32.totalorder %s14, 0
      %p48 = por %p46, %p47
      %p49 = scmp.ne.s32.totalorder %s38, %s41
      %p50 = scmp.eq.s32.totalorder %s19, 1
      %p51 = por %p49, %p50
      %p52 = scmp.ne.s32.totalorder %s41, %s42
      %p53 = scmp.eq.s32.totalorder %s19, 0
      %p54 = por %p52, %p53
      %p55 = scmp.ne.s32.totalorder %s41, %s42
      %p56 = scmp.eq.s32.totalorder %s20, 1
      %p57 = por %p55, %p56
      %p59 = scmp.ne.s32.totalorder %s42, %s58
      %p60 = scmp.eq.s32.totalorder %s20, 0
      %p61 = por %p59, %p60
      %s62 = ssub.s32 %s21, %s33
      %s63 = ssub.s32 %s22, %s29
      %s64 = sor.u32 %s62, %s63
      %p65 = scmp.eq.s32.totalorder %s64, 0
      %s67 = sadd.s32 %s66, 1
      %s68 = scalar_select %p65, %s66, %s67
      %p71 = pneg %p65
      %p72 = scmp.eq.s32.totalorder %s14, 1
      %p73 = por %p71, %p72
      %p74 = scmp.ne.s32.totalorder %s66, %s69
      %p75 = scmp.eq.s32.totalorder %s14, 0
      %p76 = por %p74, %p75
      %p77 = scmp.ne.s32.totalorder %s66, %s69
      %p78 = scmp.eq.s32.totalorder %s19, 1
      %p79 = por %p77, %p78
      %p80 = scmp.ne.s32.totalorder %s69, %s70
      %p81 = scmp.eq.s32.totalorder %s19, 0
      %p82 = por %p80, %p81
      %p83 = scmp.ne.s32.totalorder %s69, %s70
      %p84 = scmp.eq.s32.totalorder %s20, 1
      %p85 = por %p83, %p84
      %p87 = scmp.ne.s32.totalorder %s70, %s86
      %p88 = scmp.eq.s32.totalorder %s20, 0
      %p89 = por %p87, %p88
      %s90 = ssub.s32 %s22, %s29
      %p91 = scmp.eq.s32.totalorder %s90, 0
      %s93 = sadd.s32 %s92, 1
      %s94 = scalar_select %p91, %s92, %s93
      %p97 = pneg %p91
      %p98 = scmp.eq.s32.totalorder %s14, 1
      %p99 = por %p97, %p98
      %p100 = scmp.ne.s32.totalorder %s92, %s95
      %p101 = scmp.eq.s32.totalorder %s14, 0
      %p102 = por %p100, %p101
      %p103 = scmp.ne.s32.totalorder %s92, %s95
      %p104 = scmp.eq.s32.totalorder %s19, 1
      %p105 = por %p103, %p104
      %p106 = scmp.ne.s32.totalorder %s95, %s96
      %p107 = scmp.eq.s32.totalorder %s19, 0
      %p108 = por %p106, %p107
      %p109 = scmp.ne.s32.totalorder %s95, %s96
      %p110 = scmp.eq.s32.totalorder %s20, 1
      %p111 = por %p109, %p110
      %p113 = scmp.ne.s32.totalorder %s96, %s112
      %p114 = scmp.eq.s32.totalorder %s20, 0
      %p115 = por %p113, %p114
      %s116 = ssub.s32 %s22, %s29
      %p117 = scmp.eq.s32.totalorder %s116, 0
      %s119 = sadd.s32 %s118, 1
      %s120 = scalar_select %p117, %s118, %s119
      %p123 = pneg %p117
      %p124 = scmp.eq.s32.totalorder %s14, 1
      %p125 = por %p123, %p124
      %p126 = scmp.ne.s32.totalorder %s118, %s121
      %p127 = scmp.eq.s32.totalorder %s14, 0
      %p128 = por %p126, %p127
      %p129 = scmp.ne.s32.totalorder %s118, %s121
      %p130 = scmp.eq.s32.totalorder %s19, 1
      %p131 = por %p129, %p130
      %p132 = scmp.ne.s32.totalorder %s121, %s122
      %p133 = scmp.eq.s32.totalorder %s19, 0
      %p134 = por %p132, %p133
      %p135 = scmp.ne.s32.totalorder %s121, %s122
      %p136 = scmp.eq.s32.totalorder %s20, 1
      %p137 = por %p135, %p136
      %p139 = scmp.ne.s32.totalorder %s122, %s138
      %p140 = scmp.eq.s32.totalorder %s20, 0
      %p141 = por %p139, %p140
      %s142 = ssub.s32 %s22, %s29
      %p143 = scmp.eq.s32.totalorder %s142, 0
      %s145 = sadd.s32 %s144, 1
      %s146 = scalar_select %p143, %s144, %s145
      %p149 = pneg %p143
      %p150 = scmp.eq.s32.totalorder %s14, 1
      %p151 = por %p149, %p150
      %p152 = scmp.ne.s32.totalorder %s144, %s147
      %p153 = scmp.eq.s32.totalorder %s14, 0
      %p154 = por %p152, %p153
      %p155 = scmp.ne.s32.totalorder %s144, %s147
      %p156 = scmp.eq.s32.totalorder %s19, 1
      %p157 = por %p155, %p156
      %p158 = scmp.ne.s32.totalorder %s147, %s148
      %p159 = scmp.eq.s32.totalorder %s19, 0
      %p160 = por %p158, %p159
      %p161 = scmp.ne.s32.totalorder %s147, %s148
      %p162 = scmp.eq.s32.totalorder %s20, 1
      %p163 = por %p161, %p162
      %p165 = scmp.ne.s32.totalorder %s148, %s164
      %p166 = scmp.eq.s32.totalorder %s20, 0
      %p167 = por %p165, %p166
      %s168 = ssub.s32 %s21, %s33
      %p169 = scmp.eq.s32.totalorder %s168, 0
      %s171 = sadd.s32 %s170, 1
      %s172 = scalar_select %p169, %s170, %s171
      %p175 = pneg %p169
      %p176 = scmp.eq.s32.totalorder %s14, 1
      %p177 = por %p175, %p176
      %p178 = scmp.ne.s32.totalorder %s170, %s173
      %p179 = scmp.eq.s32.totalorder %s14, 0
      %p180 = por %p178, %p179
      %p181 = scmp.ne.s32.totalorder %s170, %s173
      %p182 = scmp.eq.s32.totalorder %s19, 1
      %p183 = por %p181, %p182
      %p184 = scmp.ne.s32.totalorder %s173, %s174
      %p185 = scmp.eq.s32.totalorder %s19, 0
      %p186 = por %p184, %p185
      %p187 = scmp.ne.s32.totalorder %s173, %s174
      %p188 = scmp.eq.s32.totalorder %s20, 1
      %p189 = por %p187, %p188
      %p191 = scmp.ne.s32.totalorder %s174, %s190
      %p192 = scmp.eq.s32.totalorder %s20, 0
      %p193 = por %p191, %p192
      %p194 = scmp.le.s32.totalorder 1, %s14
      %p195 = scmp.lt.s32.totalorder %s14, 3
      %p196 = pnand %p194, %p195
      %p197 = pneg %p196
      // Predicated region
      $region9: #{tpu_custom_call.1} parent=5 // pred_check
        _
      $region10: #{tpu_custom_call.1} parent=5 // pred_check_branch
        %199 = sbr.rel (%p196) target = $region12
      $region11: #{tpu_custom_call.1} parent=5 // pred_region
        %s200 = ssub.s32 %s14, 1
        // Predicated region
        $region13: #{tpu_custom_call.1} parent=11 // pred_check
          %p201 = pneg %p108
        $region14: #{tpu_custom_call.1} parent=11 // pred_check_branch
          %203 = sbr.rel (%p201) target = $region16
        $region15: #{tpu_custom_call.1} parent=11 // pred_region
          %p204 = scmp.lt.s32.totalorder %s24, 0
          %s205 = scalar_select %p204, %s24, 0
          %s206 = smul.addr %s205, 8
          %s207 = scalar_lea.vmem %s2, %s206
        $region16: #{tpu_custom_call.1} parent=11 // pred_fallthru
          _
        // Predicated region
        $region17: #{tpu_custom_call.1} parent=11 // pred_check
          %p208 = pneg %p134
        $region18: #{tpu_custom_call.1} parent=11 // pred_check_branch
          %210 = sbr.rel (%p208) target = $region20
        $region19: #{tpu_custom_call.1} parent=11 // pred_region
          %s211 = smul.u32 16, %s24
          %p212 = scmp.lt.s32.totalorder %s211, 15
          %s213 = scalar_select %p212, %s211, 15
          %s214 = smul.addr %s213, 8
          %s215 = scalar_lea.vmem %s3, %s214
          %s216 = smul.u32 16, %s24
        $region20: #{tpu_custom_call.1} parent=11 // pred_fallthru
          _
        // Predicated region
        $region21: #{tpu_custom_call.1} parent=11 // pred_check
          %p217 = pneg %p160
        $region22: #{tpu_custom_call.1} parent=11 // pred_check_branch
          %219 = sbr.rel (%p217) target = $region24
        $region23: #{tpu_custom_call.1} parent=11 // pred_region
          %s220 = smul.u32 16, %s24
          %p221 = scmp.lt.s32.totalorder %s220, 15
          %s222 = scalar_select %p221, %s220, 15
          %s223 = smul.addr %s222, 8
          %s224 = scalar_lea.vmem %s4, %s223
          %s225 = smul.u32 16, %s24
        $region24: #{tpu_custom_call.1} parent=11 // pred_fallthru
          _
      $region12: #{tpu_custom_call.1} parent=5 // pred_fallthru
        _
      %p226 = scmp.lt.s32.totalorder %s14, 2
      // Predicated region
      $region25: #{tpu_custom_call.1} parent=5 // pred_check
        %p227 = pneg %p226
      $region26: #{tpu_custom_call.1} parent=5 // pred_check_branch
        %229 = sbr.rel (%p227) target = $region28
      $region27: #{tpu_custom_call.1} parent=5 // pred_region
        // Predicated region
        $region29: #{tpu_custom_call.1} parent=27 // pred_check
          %p230 = pneg %p48
        $region30: #{tpu_custom_call.1} parent=27 // pred_check_branch
          %232 = sbr.rel (%p230) target = $region32
        $region31: #{tpu_custom_call.1} parent=27 // pred_region
          %s233 = smul.u32 16, %s22
          %p234 = scmp.lt.s32.totalorder %s21, 1
          %s235 = scalar_select %p234, %s21, 1
          %p236 = scmp.lt.s32.totalorder %s233, 15
          %s237 = scalar_select %p236, %s233, 15
          %s238 = smul.addr %s235, 16
          %s239 = sadd.s32 %s237, %s238
          %s240 = smul.addr %s239, 4
          %s241 = scalar_lea.vmem %s0, %s240
          %s242 = smul.u32 16, %s22
        $region32: #{tpu_custom_call.1} parent=27 // pred_fallthru
          _
        // Predicated region
        $region33: #{tpu_custom_call.1} parent=27 // pred_check
          %p243 = pneg %p76
        $region34: #{tpu_custom_call.1} parent=27 // pred_check_branch
          %245 = sbr.rel (%p243) target = $region36
        $region35: #{tpu_custom_call.1} parent=27 // pred_region
          %p246 = scmp.lt.s32.totalorder %s21, 1
          %s247 = scalar_select %p246, %s21, 1
          %p248 = scmp.lt.s32.totalorder %s22, 0
          %s249 = scalar_select %p248, %s22, 0
          %s250 = sadd.s32 %s249, %s247
          %s251 = smul.addr %s250, 8
          %s252 = scalar_lea.vmem %s1, %s251
        $region36: #{tpu_custom_call.1} parent=27 // pred_fallthru
          _
      $region28: #{tpu_custom_call.1} parent=5 // pred_fallthru
        _
      %p253 = scmp.le.s32.totalorder 1, %s14
      %p254 = scmp.lt.s32.totalorder %s14, 3
      %p255 = pnand %p253, %p254
      %p256 = pneg %p255
      // Predicated region
      $region37: #{tpu_custom_call.1} parent=5 // pred_check
        _
      $region38: #{tpu_custom_call.1} parent=5 // pred_check_branch
        %258 = sbr.rel (%p255) target = $region40
      $region39: #{tpu_custom_call.1} parent=5 // pred_region
        %s259 = ssub.s32 %s14, 1
        %s260 = smul.u32 16, %s24
        %p261 = scmp.lt.s32.totalorder %s23, 1
        %s262 = scalar_select %p261, %s23, 1
        %p263 = scmp.lt.s32.totalorder %s260, 15
        %s264 = scalar_select %p263, %s260, 15
        %s265 = smul.addr %s262, 16
        %s266 = sadd.s32 %s264, %s265
        %s267 = smul.addr %s266, 4
        %s268 = scalar_lea.vmem %s0, %s267
        %p269 = pneg %p54
        %p270 = pneg %p51
        %p271 = scmp.lt.s32.totalorder %s23, 1
        %s272 = scalar_select %p271, %s23, 1
        %p273 = scmp.lt.s32.totalorder %s24, 0
        %s274 = scalar_select %p273, %s24, 0
        %s275 = sadd.s32 %s274, %s272
        %s276 = smul.addr %s275, 8
        %s277 = scalar_lea.vmem %s1, %s276
        %p278 = pneg %p82
        %p279 = pneg %p79
        %p280 = scmp.lt.s32.totalorder %s24, 0
        %s281 = scalar_select %p280, %s24, 0
        %s282 = smul.addr %s281, 8
        %s283 = scalar_lea.vmem %s2, %s282
        %p284 = pneg %p108
        %p285 = pneg %p105
        %s286 = smul.u32 16, %s24
        %p287 = scmp.lt.s32.totalorder %s286, 15
        %s288 = scalar_select %p287, %s286, 15
        %s289 = smul.addr %s288, 8
        %s290 = scalar_lea.vmem %s3, %s289
        %p291 = pneg %p134
        %p292 = pneg %p131
        %s293 = smul.u32 16, %s24
        %p294 = scmp.lt.s32.totalorder %s293, 15
        %s295 = scalar_select %p294, %s293, 15
        %s296 = smul.addr %s295, 8
        %s297 = scalar_lea.vmem %s4, %s296
        %p298 = pneg %p160
        %p299 = pneg %p157
        %p300 = pneg %p186
        %p301 = pneg %p183
        %s302 = sand.u32 %s173, 1
        %s303 = scalar_lea.sflag [#allocation3], %s302
        %s304 = sand.u32 %s173, 1
        %s305 = smul.addr %s304, 8
        %s306 = scalar_lea.vmem [#allocation2], %s305
        %s307 = smul.u32 16, %s24
        %p308 = scmp.lt.s32.totalorder %s23, 1
        %s309 = scalar_select %p308, %s23, 1
        %p310 = scmp.lt.s32.totalorder %s307, 15
        %s311 = scalar_select %p310, %s307, 15
        %s312 = smul.addr %s309, 16
        %s313 = sadd.s32 %s311, %s312
        %s314 = smul.addr %s313, 4
        %s315 = scalar_lea.vmem %s0, %s314
        %s316 = smul.u32 16, %s24
        %p317 = scmp.lt.s32.totalorder %s23, 1
        %s318 = scalar_select %p317, %s23, 1
        %p319 = scmp.lt.s32.totalorder %s24, 0
        %s320 = scalar_select %p319, %s24, 0
        %s321 = sadd.s32 %s320, %s318
        %s322 = smul.addr %s321, 8
        %s323 = scalar_lea.vmem %s1, %s322
        %p324 = scmp.lt.s32.totalorder %s24, 0
        %s325 = scalar_select %p324, %s24, 0
        %s326 = smul.addr %s325, 8
        %s327 = scalar_lea.vmem %s2, %s326
        %s328 = smul.u32 16, %s24
        %p329 = scmp.lt.s32.totalorder %s328, 15
        %s330 = scalar_select %p329, %s328, 15
        %s331 = smul.addr %s330, 8
        %s332 = scalar_lea.vmem %s3, %s331
        %s333 = smul.u32 16, %s24
        %s334 = smul.u32 16, %s24
        %p335 = scmp.lt.s32.totalorder %s334, 15
        %s336 = scalar_select %p335, %s334, 15
        %s337 = smul.addr %s336, 8
        %s338 = scalar_lea.vmem %s4, %s337
        %s339 = smul.u32 16, %s24
        %p340 = scmp.eq.s32.totalorder %s24, 0
        // Predicated region
        $region41: #{tpu_custom_call.1} parent=39 // pred_check
          %p341 = pneg %p340
        $region42: #{tpu_custom_call.1} parent=39 // pred_check_branch
          %343 = sbr.rel (%p341) target = $region44
        $region43: #{tpu_custom_call.1} parent=39 // pred_region
          %344 = vst [vmem:[%s306] sm:$0xff] 0.0
        $region44: #{tpu_custom_call.1} parent=39 // pred_fallthru
          _
        %v345 = vld [vmem:[%s315] sm:$0xf]
        %v346 = vld [vmem:[%s315 + $0x4] sm:$0xf]
        %v347 = vld [vmem:[%s315 + $0x8] sm:$0xf]
        %v348 = vld [vmem:[%s315 + $0xc] sm:$0xf]
        %v349 = vld [vmem:[%s315 + $0x10] sm:$0xf]
        %v350 = vld [vmem:[%s315 + $0x14] sm:$0xf]
        %v351 = vld [vmem:[%s315 + $0x18] sm:$0xf]
        %v352 = vld [vmem:[%s315 + $0x1c] sm:$0xf]
        %v353 = vld [vmem:[%s315 + $0x20] sm:$0xf]
        %v354 = vld [vmem:[%s315 + $0x24] sm:$0xf]
        %v355 = vld [vmem:[%s315 + $0x28] sm:$0xf]
        %v356 = vld [vmem:[%s315 + $0x2c] sm:$0xf]
        %v357 = vld [vmem:[%s315 + $0x30] sm:$0xf]
        %v358 = vld [vmem:[%s315 + $0x34] sm:$0xf]
        %v359 = vld [vmem:[%s315 + $0x38] sm:$0xf]
        %v360 = vld [vmem:[%s315 + $0x3c] sm:$0xf]
        %v361 = vunpack.c.l.bf16 %v345
        %v362 = vunpack.c.l.bf16 %v346
        %v363 = vunpack.c.l.bf16 %v347
        %v364 = vunpack.c.l.bf16 %v348
        %v365 = vunpack.c.l.bf16 %v349
        %v366 = vunpack.c.l.bf16 %v350
        %v367 = vunpack.c.l.bf16 %v351
        %v368 = vunpack.c.l.bf16 %v352
        %v369 = vunpack.c.l.bf16 %v353
        %v370 = vunpack.c.l.bf16 %v354
        %v371 = vunpack.c.l.bf16 %v355
        %v372 = vunpack.c.l.bf16 %v356
        %v373 = vunpack.c.l.bf16 %v357
        %v374 = vunpack.c.l.bf16 %v358
        %v375 = vunpack.c.l.bf16 %v359
        %v376 = vunpack.c.l.bf16 %v360
        %v377 = vld [vmem:[%s332] sm:$0xff]
        %v378 = vld [vmem:[%s332 + $0x8] sm:$0xff]
        %v379 = vld [vmem:[%s332 + $0x10] sm:$0xff]
        %v380 = vld [vmem:[%s332 + $0x18] sm:$0xff]
        %v381 = vld [vmem:[%s332 + $0x20] sm:$0xff]
        %v382 = vld [vmem:[%s332 + $0x28] sm:$0xff]
        %v383 = vld [vmem:[%s332 + $0x30] sm:$0xff]
        %v384 = vld [vmem:[%s332 + $0x38] sm:$0xff]
        %v385 = vld [vmem:[%s332 + $0x40] sm:$0xff]
        %v386 = vld [vmem:[%s332 + $0x48] sm:$0xff]
        %v387 = vld [vmem:[%s332 + $0x50] sm:$0xff]
        %v388 = vld [vmem:[%s332 + $0x58] sm:$0xff]
        %v389 = vld [vmem:[%s332 + $0x60] sm:$0xff]
        %v390 = vld [vmem:[%s332 + $0x68] sm:$0xff]
        %v391 = vld [vmem:[%s332 + $0x70] sm:$0xff]
        %v392 = vld [vmem:[%s332 + $0x78] sm:$0xff]
        %v393 = vld [vmem:[%s338] sm:$0xff]
        %v394 = vld [vmem:[%s338 + $0x8] sm:$0xff]
        %v395 = vld [vmem:[%s338 + $0x10] sm:$0xff]
        %v396 = vld [vmem:[%s338 + $0x18] sm:$0xff]
        %v397 = vld [vmem:[%s338 + $0x20] sm:$0xff]
        %v398 = vld [vmem:[%s338 + $0x28] sm:$0xff]
        %v399 = vld [vmem:[%s338 + $0x30] sm:$0xff]
        %v400 = vld [vmem:[%s338 + $0x38] sm:$0xff]
        %v401 = vld [vmem:[%s338 + $0x40] sm:$0xff]
        %v402 = vld [vmem:[%s338 + $0x48] sm:$0xff]
        %v403 = vld [vmem:[%s338 + $0x50] sm:$0xff]
        %v404 = vld [vmem:[%s338 + $0x58] sm:$0xff]
        %v405 = vld [vmem:[%s338 + $0x60] sm:$0xff]
        %v406 = vld [vmem:[%s338 + $0x68] sm:$0xff]
        %v407 = vld [vmem:[%s338 + $0x70] sm:$0xff]
        %v408 = vld [vmem:[%s338 + $0x78] sm:$0xff]
        %v409 = vlaneseq
        %v410 = vand.u32 %v409, 127
        %411 = vset.pattern.permute.xlu0 0
        %412 = vperm.xlu0 %411, %v377
        %v413 = vpop.permute.xlu0 %412
        %414 = vset.pattern.permute.xlu0 0
        %415 = vperm.xlu0 %414, %v378
        %v416 = vpop.permute.xlu0 %415
        %417 = vset.pattern.permute.xlu0 0
        %418 = vperm.xlu0 %417, %v379
        %v419 = vpop.permute.xlu0 %418
        %420 = vset.pattern.permute.xlu0 0
        %421 = vperm.xlu0 %420, %v380
        %v422 = vpop.permute.xlu0 %421
        %423 = vset.pattern.permute.xlu0 0
        %424 = vperm.xlu0 %423, %v381
        %v425 = vpop.permute.xlu0 %424
        %426 = vset.pattern.permute.xlu0 0
        %427 = vperm.xlu0 %426, %v382
        %v428 = vpop.permute.xlu0 %427
        %429 = vset.pattern.permute.xlu0 0
        %430 = vperm.xlu0 %429, %v383
        %v431 = vpop.permute.xlu0 %430
        %432 = vset.pattern.permute.xlu0 0
        %433 = vperm.xlu0 %432, %v384
        %v434 = vpop.permute.xlu0 %433
        %435 = vset.pattern.permute.xlu0 0
        %436 = vperm.xlu0 %435, %v385
        %v437 = vpop.permute.xlu0 %436
        %438 = vset.pattern.permute.xlu0 0
        %439 = vperm.xlu0 %438, %v386
        %v440 = vpop.permute.xlu0 %439
        %441 = vset.pattern.permute.xlu0 0
        %442 = vperm.xlu0 %441, %v387
        %v443 = vpop.permute.xlu0 %442
        %444 = vset.pattern.permute.xlu0 0
        %445 = vperm.xlu0 %444, %v388
        %v446 = vpop.permute.xlu0 %445
        %447 = vset.pattern.permute.xlu0 0
        %448 = vperm.xlu0 %447, %v389
        %v449 = vpop.permute.xlu0 %448
        %450 = vset.pattern.permute.xlu0 0
        %451 = vperm.xlu0 %450, %v390
        %v452 = vpop.permute.xlu0 %451
        %453 = vset.pattern.permute.xlu0 0
        %454 = vperm.xlu0 %453, %v391
        %v455 = vpop.permute.xlu0 %454
        %456 = vset.pattern.permute.xlu0 0
        %457 = vperm.xlu0 %456, %v392
        %v458 = vpop.permute.xlu0 %457
        %vm459 = vcmp.eq.s32.totalorder %v410, %v413
        %vm460 = vcmp.eq.s32.totalorder %v410, %v416
        %vm461 = vcmp.eq.s32.totalorder %v410, %v419
        %vm462 = vcmp.eq.s32.totalorder %v410, %v422
        %vm463 = vcmp.eq.s32.totalorder %v410, %v425
        %vm464 = vcmp.eq.s32.totalorder %v410, %v428
        %vm465 = vcmp.eq.s32.totalorder %v410, %v431
        %vm466 = vcmp.eq.s32.totalorder %v410, %v434
        %vm467 = vcmp.eq.s32.totalorder %v410, %v437
        %vm468 = vcmp.eq.s32.totalorder %v410, %v440
        %vm469 = vcmp.eq.s32.totalorder %v410, %v443
        %vm470 = vcmp.eq.s32.totalorder %v410, %v446
        %vm471 = vcmp.eq.s32.totalorder %v410, %v449
        %vm472 = vcmp.eq.s32.totalorder %v410, %v452
        %vm473 = vcmp.eq.s32.totalorder %v410, %v455
        %vm474 = vcmp.eq.s32.totalorder %v410, %v458
        %v475 = vsel %vm459, 1, 0
        %v476 = vsel %vm460, 1, 0
        %v477 = vsel %vm461, 1, 0
        %v478 = vsel %vm462, 1, 0
        %v479 = vsel %vm463, 1, 0
        %v480 = vsel %vm464, 1, 0
        %v481 = vsel %vm465, 1, 0
        %v482 = vsel %vm466, 1, 0
        %v483 = vsel %vm467, 1, 0
        %v484 = vsel %vm468, 1, 0
        %v485 = vsel %vm469, 1, 0
        %v486 = vsel %vm470, 1, 0
        %v487 = vsel %vm471, 1, 0
        %v488 = vsel %vm472, 1, 0
        %v489 = vsel %vm473, 1, 0
        %v490 = vsel %vm474, 1, 0
        %v491 = vcvt.s32.f32 %v475
        %v492 = vcvt.s32.f32 %v476
        %v493 = vcvt.s32.f32 %v477
        %v494 = vcvt.s32.f32 %v478
        %v495 = vcvt.s32.f32 %v479
        %v496 = vcvt.s32.f32 %v480
        %v497 = vcvt.s32.f32 %v481
        %v498 = vcvt.s32.f32 %v482
        %v499 = vcvt.s32.f32 %v483
        %v500 = vcvt.s32.f32 %v484
        %v501 = vcvt.s32.f32 %v485
        %v502 = vcvt.s32.f32 %v486
        %v503 = vcvt.s32.f32 %v487
        %v504 = vcvt.s32.f32 %v488
        %v505 = vcvt.s32.f32 %v489
        %v506 = vcvt.s32.f32 %v490
        %v507 = vand.u32 2147483647, %v361
        %v508 = vand.u32 2147483647, %v362
        %v509 = vand.u32 2147483647, %v363
        %v510 = vand.u32 2147483647, %v364
        %v511 = vand.u32 2147483647, %v365
        %v512 = vand.u32 2147483647, %v366
        %v513 = vand.u32 2147483647, %v367
        %v514 = vand.u32 2147483647, %v368
        %v515 = vand.u32 2147483647, %v369
        %v516 = vand.u32 2147483647, %v370
        %v517 = vand.u32 2147483647, %v371
        %v518 = vand.u32 2147483647, %v372
        %v519 = vand.u32 2147483647, %v373
        %v520 = vand.u32 2147483647, %v374
        %v521 = vand.u32 2147483647, %v375
        %v522 = vand.u32 2147483647, %v376
        %v523 = vsub.f32 0.0, %v507
        %v524 = vsub.f32 0.0, %v508
        %v525 = vsub.f32 0.0, %v509
        %v526 = vsub.f32 0.0, %v510
        %v527 = vsub.f32 0.0, %v511
        %v528 = vsub.f32 0.0, %v512
        %v529 = vsub.f32 0.0, %v513
        %v530 = vsub.f32 0.0, %v514
        %v531 = vsub.f32 0.0, %v515
        %v532 = vsub.f32 0.0, %v516
        %v533 = vsub.f32 0.0, %v517
        %v534 = vsub.f32 0.0, %v518
        %v535 = vsub.f32 0.0, %v519
        %v536 = vsub.f32 0.0, %v520
        %v537 = vsub.f32 0.0, %v521
        %v538 = vsub.f32 0.0, %v522
        %v539 = vmul.f32 %v523, 1.442695
        %v540 = vpow.pop %v539
        %v541 = vmul.f32 %v524, 1.442695
        %v542 = vpow.pop %v541
        %v543 = vmul.f32 %v525, 1.442695
        %v544 = vpow.pop %v543
        %v545 = vmul.f32 %v526, 1.442695
        %v546 = vpow.pop %v545
        %v547 = vmul.f32 %v527, 1.442695
        %v548 = vpow.pop %v547
        %v549 = vmul.f32 %v528, 1.442695
        %v550 = vpow.pop %v549
        %v551 = vmul.f32 %v529, 1.442695
        %v552 = vpow.pop %v551
        %v553 = vmul.f32 %v530, 1.442695
        %v554 = vpow.pop %v553
        %v555 = vmul.f32 %v531, 1.442695
        %v556 = vpow.pop %v555
        %v557 = vmul.f32 %v532, 1.442695
        %v558 = vpow.pop %v557
        %v559 = vmul.f32 %v533, 1.442695
        %v560 = vpow.pop %v559
        %v561 = vmul.f32 %v534, 1.442695
        %v562 = vpow.pop %v561
        %v563 = vmul.f32 %v535, 1.442695
        %v564 = vpow.pop %v563
        %v565 = vmul.f32 %v536, 1.442695
        %v566 = vpow.pop %v565
        %v567 = vmul.f32 %v537, 1.442695
        %v568 = vpow.pop %v567
        %v569 = vmul.f32 %v538, 1.442695
        %v570 = vpow.pop %v569
        %v571 = vadd.f32 %v540, 1.0
        %v572 = vadd.f32 %v542, 1.0
        %v573 = vadd.f32 %v544, 1.0
        %v574 = vadd.f32 %v546, 1.0
        %v575 = vadd.f32 %v548, 1.0
        %v576 = vadd.f32 %v550, 1.0
        %v577 = vadd.f32 %v552, 1.0
        %v578 = vadd.f32 %v554, 1.0
        %v579 = vadd.f32 %v556, 1.0
        %v580 = vadd.f32 %v558, 1.0
        %v581 = vadd.f32 %v560, 1.0
        %v582 = vadd.f32 %v562, 1.0
        %v583 = vadd.f32 %v564, 1.0
        %v584 = vadd.f32 %v566, 1.0
        %v585 = vadd.f32 %v568, 1.0
        %v586 = vadd.f32 %v570, 1.0
        %v587 = vrcp.pop %v571
        %v588 = vrcp.pop %v572
        %v589 = vrcp.pop %v573
        %v590 = vrcp.pop %v574
        %v591 = vrcp.pop %v575
        %v592 = vrcp.pop %v576
        %v593 = vrcp.pop %v577
        %v594 = vrcp.pop %v578
        %v595 = vrcp.pop %v579
        %v596 = vrcp.pop %v580
        %v597 = vrcp.pop %v581
        %v598 = vrcp.pop %v582
        %v599 = vrcp.pop %v583
        %v600 = vrcp.pop %v584
        %v601 = vrcp.pop %v585
        %v602 = vrcp.pop %v586
        %vm603 = vcmp.ge.f32.partialorder %v361, 0.0
        %vm604 = vcmp.ge.f32.partialorder %v362, 0.0
        %vm605 = vcmp.ge.f32.partialorder %v363, 0.0
        %vm606 = vcmp.ge.f32.partialorder %v364, 0.0
        %vm607 = vcmp.ge.f32.partialorder %v365, 0.0
        %vm608 = vcmp.ge.f32.partialorder %v366, 0.0
        %vm609 = vcmp.ge.f32.partialorder %v367, 0.0
        %vm610 = vcmp.ge.f32.partialorder %v368, 0.0
        %vm611 = vcmp.ge.f32.partialorder %v369, 0.0
        %vm612 = vcmp.ge.f32.partialorder %v370, 0.0
        %vm613 = vcmp.ge.f32.partialorder %v371, 0.0
        %vm614 = vcmp.ge.f32.partialorder %v372, 0.0
        %vm615 = vcmp.ge.f32.partialorder %v373, 0.0
        %vm616 = vcmp.ge.f32.partialorder %v374, 0.0
        %vm617 = vcmp.ge.f32.partialorder %v375, 0.0
        %vm618 = vcmp.ge.f32.partialorder %v376, 0.0
        %v619 = vmul.f32 %v540, %v587
        %v620 = vmul.f32 %v542, %v588
        %v621 = vmul.f32 %v544, %v589
        %v622 = vmul.f32 %v546, %v590
        %v623 = vmul.f32 %v548, %v591
        %v624 = vmul.f32 %v550, %v592
        %v625 = vmul.f32 %v552, %v593
        %v626 = vmul.f32 %v554, %v594
        %v627 = vmul.f32 %v556, %v595
        %v628 = vmul.f32 %v558, %v596
        %v629 = vmul.f32 %v560, %v597
        %v630 = vmul.f32 %v562, %v598
        %v631 = vmul.f32 %v564, %v599
        %v632 = vmul.f32 %v566, %v600
        %v633 = vmul.f32 %v568, %v601
        %v634 = vmul.f32 %v570, %v602
        %v635 = vsel %vm603, %v587, %v619
        %v636 = vsel %vm604, %v588, %v620
        %v637 = vsel %vm605, %v589, %v621
        %v638 = vsel %vm606, %v590, %v622
        %v639 = vsel %vm607, %v591, %v623
        %v640 = vsel %vm608, %v592, %v624
        %v641 = vsel %vm609, %v593, %v625
        %v642 = vsel %vm610, %v594, %v626
        %v643 = vsel %vm611, %v595, %v627
        %v644 = vsel %vm612, %v596, %v628
        %v645 = vsel %vm613, %v597, %v629
        %v646 = vsel %vm614, %v598, %v630
        %v647 = vsel %vm615, %v599, %v631
        %v648 = vsel %vm616, %v600, %v632
        %v649 = vsel %vm617, %v601, %v633
        %v650 = vsel %vm618, %v602, %v634
        %v651 = vmax.f32 %v361, 0.0
        %v652 = vmax.f32 %v362, 0.0
        %v653 = vmax.f32 %v363, 0.0
        %v654 = vmax.f32 %v364, 0.0
        %v655 = vmax.f32 %v365, 0.0
        %v656 = vmax.f32 %v366, 0.0
        %v657 = vmax.f32 %v367, 0.0
        %v658 = vmax.f32 %v368, 0.0
        %v659 = vmax.f32 %v369, 0.0
        %v660 = vmax.f32 %v370, 0.0
        %v661 = vmax.f32 %v371, 0.0
        %v662 = vmax.f32 %v372, 0.0
        %v663 = vmax.f32 %v373, 0.0
        %v664 = vmax.f32 %v374, 0.0
        %v665 = vmax.f32 %v375, 0.0
        %v666 = vmax.f32 %v376, 0.0
        %v667 = vmul.f32 %v361, %v491
        %v668 = vmul.f32 %v362, %v492
        %v669 = vmul.f32 %v363, %v493
        %v670 = vmul.f32 %v364, %v494
        %v671 = vmul.f32 %v365, %v495
        %v672 = vmul.f32 %v366, %v496
        %v673 = vmul.f32 %v367, %v497
        %v674 = vmul.f32 %v368, %v498
        %v675 = vmul.f32 %v369, %v499
        %v676 = vmul.f32 %v370, %v500
        %v677 = vmul.f32 %v371, %v501
        %v678 = vmul.f32 %v372, %v502
        %v679 = vmul.f32 %v373, %v503
        %v680 = vmul.f32 %v374, %v504
        %v681 = vmul.f32 %v375, %v505
        %v682 = vmul.f32 %v376, %v506
        %v683 = vsub.f32 %v651, %v667
        %v684 = vsub.f32 %v652, %v668
        %v685 = vsub.f32 %v653, %v669
        %v686 = vsub.f32 %v654, %v670
        %v687 = vsub.f32 %v655, %v671
        %v688 = vsub.f32 %v656, %v672
        %v689 = vsub.f32 %v657, %v673
        %v690 = vsub.f32 %v658, %v674
        %v691 = vsub.f32 %v659, %v675
        %v692 = vsub.f32 %v660, %v676
        %v693 = vsub.f32 %v661, %v677
        %v694 = vsub.f32 %v662, %v678
        %v695 = vsub.f32 %v663, %v679
        %v696 = vsub.f32 %v664, %v680
        %v697 = vsub.f32 %v665, %v681
        %v698 = vsub.f32 %v666, %v682
        %v699 = vadd.f32 %v540, 1.0
        %v700 = vlog2.pop %v699
        %v701 = vmul.f32 %v700, 0.6931472
        %v702 = vmul.f32 -0.5, %v540
        %v703 = vadd.f32 %v702, 1.0
        %v704 = vmul.f32 %v703, %v540
        %v705 = vand.u32 2147483647, %v540
        %vm706 = vcmp.lt.f32.partialorder %v705, 0.0004427343
        %v707 = vsel %vm706, %v704, %v701
        %v708 = vadd.f32 %v542, 1.0
        %v709 = vlog2.pop %v708
        %v710 = vmul.f32 %v709, 0.6931472
        %v711 = vmul.f32 -0.5, %v542
        %v712 = vadd.f32 %v711, 1.0
        %v713 = vmul.f32 %v712, %v542
        %v714 = vand.u32 2147483647, %v542
        %vm715 = vcmp.lt.f32.partialorder %v714, 0.0004427343
        %v716 = vsel %vm715, %v713, %v710
        %v717 = vadd.f32 %v544, 1.0
        %v718 = vlog2.pop %v717
        %v719 = vmul.f32 %v718, 0.6931472
        %v720 = vmul.f32 -0.5, %v544
        %v721 = vadd.f32 %v720, 1.0
        %v722 = vmul.f32 %v721, %v544
        %v723 = vand.u32 2147483647, %v544
        %vm724 = vcmp.lt.f32.partialorder %v723, 0.0004427343
        %v725 = vsel %vm724, %v722, %v719
        %v726 = vadd.f32 %v546, 1.0
        %v727 = vlog2.pop %v726
        %v728 = vmul.f32 %v727, 0.6931472
        %v729 = vmul.f32 -0.5, %v546
        %v730 = vadd.f32 %v729, 1.0
        %v731 = vmul.f32 %v730, %v546
        %v732 = vand.u32 2147483647, %v546
        %vm733 = vcmp.lt.f32.partialorder %v732, 0.0004427343
        %v734 = vsel %vm733, %v731, %v728
        %v735 = vadd.f32 %v548, 1.0
        %v736 = vlog2.pop %v735
        %v737 = vmul.f32 %v736, 0.6931472
        %v738 = vmul.f32 -0.5, %v548
        %v739 = vadd.f32 %v738, 1.0
        %v740 = vmul.f32 %v739, %v548
        %v741 = vand.u32 2147483647, %v548
        %vm742 = vcmp.lt.f32.partialorder %v741, 0.0004427343
        %v743 = vsel %vm742, %v740, %v737
        %v744 = vadd.f32 %v550, 1.0
        %v745 = vlog2.pop %v744
        %v746 = vmul.f32 %v745, 0.6931472
        %v747 = vmul.f32 -0.5, %v550
        %v748 = vadd.f32 %v747, 1.0
        %v749 = vmul.f32 %v748, %v550
        %v750 = vand.u32 2147483647, %v550
        %vm751 = vcmp.lt.f32.partialorder %v750, 0.0004427343
        %v752 = vsel %vm751, %v749, %v746
        %v753 = vadd.f32 %v552, 1.0
        %v754 = vlog2.pop %v753
        %v755 = vmul.f32 %v754, 0.6931472
        %v756 = vmul.f32 -0.5, %v552
        %v757 = vadd.f32 %v756, 1.0
        %v758 = vmul.f32 %v757, %v552
        %v759 = vand.u32 2147483647, %v552
        %vm760 = vcmp.lt.f32.partialorder %v759, 0.0004427343
        %v761 = vsel %vm760, %v758, %v755
        %v762 = vadd.f32 %v554, 1.0
        %v763 = vlog2.pop %v762
        %v764 = vmul.f32 %v763, 0.6931472
        %v765 = vmul.f32 -0.5, %v554
        %v766 = vadd.f32 %v765, 1.0
        %v767 = vmul.f32 %v766, %v554
        %v768 = vand.u32 2147483647, %v554
        %vm769 = vcmp.lt.f32.partialorder %v768, 0.0004427343
        %v770 = vsel %vm769, %v767, %v764
        %v771 = vadd.f32 %v556, 1.0
        %v772 = vlog2.pop %v771
        %v773 = vmul.f32 %v772, 0.6931472
        %v774 = vmul.f32 -0.5, %v556
        %v775 = vadd.f32 %v774, 1.0
        %v776 = vmul.f32 %v775, %v556
        %v777 = vand.u32 2147483647, %v556
        %vm778 = vcmp.lt.f32.partialorder %v777, 0.0004427343
        %v779 = vsel %vm778, %v776, %v773
        %v780 = vadd.f32 %v558, 1.0
        %v781 = vlog2.pop %v780
        %v782 = vmul.f32 %v781, 0.6931472
        %v783 = vmul.f32 -0.5, %v558
        %v784 = vadd.f32 %v783, 1.0
        %v785 = vmul.f32 %v784, %v558
        %v786 = vand.u32 2147483647, %v558
        %vm787 = vcmp.lt.f32.partialorder %v786, 0.0004427343
        %v788 = vsel %vm787, %v785, %v782
        %v789 = vadd.f32 %v560, 1.0
        %v790 = vlog2.pop %v789
        %v791 = vmul.f32 %v790, 0.6931472
        %v792 = vmul.f32 -0.5, %v560
        %v793 = vadd.f32 %v792, 1.0
        %v794 = vmul.f32 %v793, %v560
        %v795 = vand.u32 2147483647, %v560
        %vm796 = vcmp.lt.f32.partialorder %v795, 0.0004427343
        %v797 = vsel %vm796, %v794, %v791
        %v798 = vadd.f32 %v562, 1.0
        %v799 = vlog2.pop %v798
        %v800 = vmul.f32 %v799, 0.6931472
        %v801 = vmul.f32 -0.5, %v562
        %v802 = vadd.f32 %v801, 1.0
        %v803 = vmul.f32 %v802, %v562
        %v804 = vand.u32 2147483647, %v562
        %vm805 = vcmp.lt.f32.partialorder %v804, 0.0004427343
        %v806 = vsel %vm805, %v803, %v800
        %v807 = vadd.f32 %v564, 1.0
        %v808 = vlog2.pop %v807
        %v809 = vmul.f32 %v808, 0.6931472
        %v810 = vmul.f32 -0.5, %v564
        %v811 = vadd.f32 %v810, 1.0
        %v812 = vmul.f32 %v811, %v564
        %v813 = vand.u32 2147483647, %v564
        %vm814 = vcmp.lt.f32.partialorder %v813, 0.0004427343
        %v815 = vsel %vm814, %v812, %v809
        %v816 = vadd.f32 %v566, 1.0
        %v817 = vlog2.pop %v816
        %v818 = vmul.f32 %v817, 0.6931472
        %v819 = vmul.f32 -0.5, %v566
        %v820 = vadd.f32 %v819, 1.0
        %v821 = vmul.f32 %v820, %v566
        %v822 = vand.u32 2147483647, %v566
        %vm823 = vcmp.lt.f32.partialorder %v822, 0.0004427343
        %v824 = vsel %vm823, %v821, %v818
        %v825 = vadd.f32 %v568, 1.0
        %v826 = vlog2.pop %v825
        %v827 = vmul.f32 %v826, 0.6931472
        %v828 = vmul.f32 -0.5, %v568
        %v829 = vadd.f32 %v828, 1.0
        %v830 = vmul.f32 %v829, %v568
        %v831 = vand.u32 2147483647, %v568
        %vm832 = vcmp.lt.f32.partialorder %v831, 0.0004427343
        %v833 = vsel %vm832, %v830, %v827
        %v834 = vadd.f32 %v570, 1.0
        %v835 = vlog2.pop %v834
        %v836 = vmul.f32 %v835, 0.6931472
        %v837 = vmul.f32 -0.5, %v570
        %v838 = vadd.f32 %v837, 1.0
        %v839 = vmul.f32 %v838, %v570
        %v840 = vand.u32 2147483647, %v570
        %vm841 = vcmp.lt.f32.partialorder %v840, 0.0004427343
        %v842 = vsel %vm841, %v839, %v836
        %v843 = vadd.f32 %v683, %v707
        %v844 = vadd.f32 %v684, %v716
        %v845 = vadd.f32 %v685, %v725
        %v846 = vadd.f32 %v686, %v734
        %v847 = vadd.f32 %v687, %v743
        %v848 = vadd.f32 %v688, %v752
        %v849 = vadd.f32 %v689, %v761
        %v850 = vadd.f32 %v690, %v770
        %v851 = vadd.f32 %v691, %v779
        %v852 = vadd.f32 %v692, %v788
        %v853 = vadd.f32 %v693, %v797
        %v854 = vadd.f32 %v694, %v806
        %v855 = vadd.f32 %v695, %v815
        %v856 = vadd.f32 %v696, %v824
        %v857 = vadd.f32 %v697, %v833
        %v858 = vadd.f32 %v698, %v842
        %v859 = vmul.f32 %v635, %v491
        %v860 = vmul.f32 %v636, %v492
        %v861 = vmul.f32 %v637, %v493
        %v862 = vmul.f32 %v638, %v494
        %v863 = vmul.f32 %v639, %v495
        %v864 = vmul.f32 %v640, %v496
        %v865 = vmul.f32 %v641, %v497
        %v866 = vmul.f32 %v642, %v498
        %v867 = vmul.f32 %v643, %v499
        %v868 = vmul.f32 %v644, %v500
        %v869 = vmul.f32 %v645, %v501
        %v870 = vmul.f32 %v646, %v502
        %v871 = vmul.f32 %v647, %v503
        %v872 = vmul.f32 %v648, %v504
        %v873 = vmul.f32 %v649, %v505
        %v874 = vmul.f32 %v650, %v506
        %v875 = vsub.f32 1.0, %v635
        %v876 = vsub.f32 1.0, %v636
        %v877 = vsub.f32 1.0, %v637
        %v878 = vsub.f32 1.0, %v638
        %v879 = vsub.f32 1.0, %v639
        %v880 = vsub.f32 1.0, %v640
        %v881 = vsub.f32 1.0, %v641
        %v882 = vsub.f32 1.0, %v642
        %v883 = vsub.f32 1.0, %v643
        %v884 = vsub.f32 1.0, %v644
        %v885 = vsub.f32 1.0, %v645
        %v886 = vsub.f32 1.0, %v646
        %v887 = vsub.f32 1.0, %v647
        %v888 = vsub.f32 1.0, %v648
        %v889 = vsub.f32 1.0, %v649
        %v890 = vsub.f32 1.0, %v650
        %v891 = vsub.f32 1.0, %v491
        %v892 = vsub.f32 1.0, %v492
        %v893 = vsub.f32 1.0, %v493
        %v894 = vsub.f32 1.0, %v494
        %v895 = vsub.f32 1.0, %v495
        %v896 = vsub.f32 1.0, %v496
        %v897 = vsub.f32 1.0, %v497
        %v898 = vsub.f32 1.0, %v498
        %v899 = vsub.f32 1.0, %v499
        %v900 = vsub.f32 1.0, %v500
        %v901 = vsub.f32 1.0, %v501
        %v902 = vsub.f32 1.0, %v502
        %v903 = vsub.f32 1.0, %v503
        %v904 = vsub.f32 1.0, %v504
        %v905 = vsub.f32 1.0, %v505
        %v906 = vsub.f32 1.0, %v506
        %v907 = vmul.f32 %v875, %v891
        %v908 = vmul.f32 %v876, %v892
        %v909 = vmul.f32 %v877, %v893
        %v910 = vmul.f32 %v878, %v894
        %v911 = vmul.f32 %v879, %v895
        %v912 = vmul.f32 %v880, %v896
        %v913 = vmul.f32 %v881, %v897
        %v914 = vmul.f32 %v882, %v898
        %v915 = vmul.f32 %v883, %v899
        %v916 = vmul.f32 %v884, %v900
        %v917 = vmul.f32 %v885, %v901
        %v918 = vmul.f32 %v886, %v902
        %v919 = vmul.f32 %v887, %v903
        %v920 = vmul.f32 %v888, %v904
        %v921 = vmul.f32 %v889, %v905
        %v922 = vmul.f32 %v890, %v906
        %v923 = vadd.f32 %v859, %v907
        %v924 = vadd.f32 %v860, %v908
        %v925 = vadd.f32 %v861, %v909
        %v926 = vadd.f32 %v862, %v910
        %v927 = vadd.f32 %v863, %v911
        %v928 = vadd.f32 %v864, %v912
        %v929 = vadd.f32 %v865, %v913
        %v930 = vadd.f32 %v866, %v914
        %v931 = vadd.f32 %v867, %v915
        %v932 = vadd.f32 %v868, %v916
        %v933 = vadd.f32 %v869, %v917
        %v934 = vadd.f32 %v870, %v918
        %v935 = vadd.f32 %v871, %v919
        %v936 = vadd.f32 %v872, %v920
        %v937 = vadd.f32 %v873, %v921
        %v938 = vadd.f32 %v874, %v922
        %v939 = vsub.f32 1.0, %v923
        %v940 = vsub.f32 1.0, %v924
        %v941 = vsub.f32 1.0, %v925
        %v942 = vsub.f32 1.0, %v926
        %v943 = vsub.f32 1.0, %v927
        %v944 = vsub.f32 1.0, %v928
        %v945 = vsub.f32 1.0, %v929
        %v946 = vsub.f32 1.0, %v930
        %v947 = vsub.f32 1.0, %v931
        %v948 = vsub.f32 1.0, %v932
        %v949 = vsub.f32 1.0, %v933
        %v950 = vsub.f32 1.0, %v934
        %v951 = vsub.f32 1.0, %v935
        %v952 = vsub.f32 1.0, %v936
        %v953 = vsub.f32 1.0, %v937
        %v954 = vsub.f32 1.0, %v938
        %v955 = vmul.f32 %v939, %v939
        %v956 = vmul.f32 %v940, %v940
        %v957 = vmul.f32 %v941, %v941
        %v958 = vmul.f32 %v942, %v942
        %v959 = vmul.f32 %v943, %v943
        %v960 = vmul.f32 %v944, %v944
        %v961 = vmul.f32 %v945, %v945
        %v962 = vmul.f32 %v946, %v946
        %v963 = vmul.f32 %v947, %v947
        %v964 = vmul.f32 %v948, %v948
        %v965 = vmul.f32 %v949, %v949
        %v966 = vmul.f32 %v950, %v950
        %v967 = vmul.f32 %v951, %v951
        %v968 = vmul.f32 %v952, %v952
        %v969 = vmul.f32 %v953, %v953
        %v970 = vmul.f32 %v954, %v954
        %v971 = vsel %vm459, 0.25, 0.75
        %v972 = vsel %vm460, 0.25, 0.75
        %v973 = vsel %vm461, 0.25, 0.75
        %v974 = vsel %vm462, 0.25, 0.75
        %v975 = vsel %vm463, 0.25, 0.75
        %v976 = vsel %vm464, 0.25, 0.75
        %v977 = vsel %vm465, 0.25, 0.75
        %v978 = vsel %vm466, 0.25, 0.75
        %v979 = vsel %vm467, 0.25, 0.75
        %v980 = vsel %vm468, 0.25, 0.75
        %v981 = vsel %vm469, 0.25, 0.75
        %v982 = vsel %vm470, 0.25, 0.75
        %v983 = vsel %vm471, 0.25, 0.75
        %v984 = vsel %vm472, 0.25, 0.75
        %v985 = vsel %vm473, 0.25, 0.75
        %v986 = vsel %vm474, 0.25, 0.75
        %988 = vset.pattern.permute.xlu0 0
        %989 = vperm.xlu0 %988, %v393
        %v990 = vpop.permute.xlu0 %989
        %993 = vset.pattern.permute.xlu0 0
        %994 = vperm.xlu0 %993, %v394
        %v995 = vpop.permute.xlu0 %994
        %998 = vset.pattern.permute.xlu0 0
        %999 = vperm.xlu0 %998, %v395
        %v1000 = vpop.permute.xlu0 %999
        %1003 = vset.pattern.permute.xlu0 0
        %1004 = vperm.xlu0 %1003, %v396
        %v1005 = vpop.permute.xlu0 %1004
        %1008 = vset.pattern.permute.xlu0 0
        %1009 = vperm.xlu0 %1008, %v397
        %v1010 = vpop.permute.xlu0 %1009
        %1013 = vset.pattern.permute.xlu0 0
        %1014 = vperm.xlu0 %1013, %v398
        %v1015 = vpop.permute.xlu0 %1014
        %1018 = vset.pattern.permute.xlu0 0
        %1019 = vperm.xlu0 %1018, %v399
        %v1020 = vpop.permute.xlu0 %1019
        %1023 = vset.pattern.permute.xlu0 0
        %1024 = vperm.xlu0 %1023, %v400
        %v1025 = vpop.permute.xlu0 %1024
        %1028 = vset.pattern.permute.xlu0 0
        %1029 = vperm.xlu0 %1028, %v401
        %v1030 = vpop.permute.xlu0 %1029
        %1033 = vset.pattern.permute.xlu0 0
        %1034 = vperm.xlu0 %1033, %v402
        %v1035 = vpop.permute.xlu0 %1034
        %1038 = vset.pattern.permute.xlu0 0
        %1039 = vperm.xlu0 %1038, %v403
        %v1040 = vpop.permute.xlu0 %1039
        %1043 = vset.pattern.permute.xlu0 0
        %1044 = vperm.xlu0 %1043, %v404
        %v1045 = vpop.permute.xlu0 %1044
        %1048 = vset.pattern.permute.xlu0 0
        %1049 = vperm.xlu0 %1048, %v405
        %v1050 = vpop.permute.xlu0 %1049
        %1053 = vset.pattern.permute.xlu0 0
        %1054 = vperm.xlu0 %1053, %v406
        %v1055 = vpop.permute.xlu0 %1054
        %1058 = vset.pattern.permute.xlu0 0
        %1059 = vperm.xlu0 %1058, %v407
        %v1060 = vpop.permute.xlu0 %1059
        %1063 = vset.pattern.permute.xlu0 0
        %1064 = vperm.xlu0 %1063, %v408
        %v1065 = vpop.permute.xlu0 %1064
        %v1067 = vmul.f32 %v971, %v990
        %v1068 = vmul.f32 %v972, %v995
        %v1069 = vmul.f32 %v973, %v1000
        %v1070 = vmul.f32 %v974, %v1005
        %v1071 = vmul.f32 %v975, %v1010
        %v1072 = vmul.f32 %v976, %v1015
        %v1073 = vmul.f32 %v977, %v1020
        %v1074 = vmul.f32 %v978, %v1025
        %v1075 = vmul.f32 %v979, %v1030
        %v1076 = vmul.f32 %v980, %v1035
        %v1077 = vmul.f32 %v981, %v1040
        %v1078 = vmul.f32 %v982, %v1045
        %v1079 = vmul.f32 %v983, %v1050
        %v1080 = vmul.f32 %v984, %v1055
        %v1081 = vmul.f32 %v985, %v1060
        %v1082 = vmul.f32 %v986, %v1065
        %v1083 = vmul.f32 %v843, %v955
        %v1084 = vmul.f32 %v844, %v956
        %v1085 = vmul.f32 %v845, %v957
        %v1086 = vmul.f32 %v846, %v958
        %v1087 = vmul.f32 %v847, %v959
        %v1088 = vmul.f32 %v848, %v960
        %v1089 = vmul.f32 %v849, %v961
        %v1090 = vmul.f32 %v850, %v962
        %v1091 = vmul.f32 %v851, %v963
        %v1092 = vmul.f32 %v852, %v964
        %v1093 = vmul.f32 %v853, %v965
        %v1094 = vmul.f32 %v854, %v966
        %v1095 = vmul.f32 %v855, %v967
        %v1096 = vmul.f32 %v856, %v968
        %v1097 = vmul.f32 %v857, %v969
        %v1098 = vmul.f32 %v858, %v970
        %v1099 = vmul.f32 %v1083, %v1067
        %v1100 = vmul.f32 %v1084, %v1068
        %v1101 = vmul.f32 %v1085, %v1069
        %v1102 = vmul.f32 %v1086, %v1070
        %v1103 = vmul.f32 %v1087, %v1071
        %v1104 = vmul.f32 %v1088, %v1072
        %v1105 = vmul.f32 %v1089, %v1073
        %v1106 = vmul.f32 %v1090, %v1074
        %v1107 = vmul.f32 %v1091, %v1075
        %v1108 = vmul.f32 %v1092, %v1076
        %v1109 = vmul.f32 %v1093, %v1077
        %v1110 = vmul.f32 %v1094, %v1078
        %v1111 = vmul.f32 %v1095, %v1079
        %v1112 = vmul.f32 %v1096, %v1080
        %v1113 = vmul.f32 %v1097, %v1081
        %v1114 = vmul.f32 %v1098, %v1082
        %vm1115 = vcmask 261120
        %v1116 = vsel %vm1115, %v1099, 0.0
        %v1117 = vsel %vm1115, %v1100, 0.0
        %v1118 = vadd.f32 %v1116, %v1117
        %v1119 = vsel %vm1115, %v1101, 0.0
        %v1120 = vadd.f32 %v1118, %v1119
        %v1121 = vsel %vm1115, %v1102, 0.0
        %v1122 = vadd.f32 %v1120, %v1121
        %v1123 = vsel %vm1115, %v1103, 0.0
        %v1124 = vadd.f32 %v1122, %v1123
        %v1125 = vsel %vm1115, %v1104, 0.0
        %v1126 = vadd.f32 %v1124, %v1125
        %v1127 = vsel %vm1115, %v1105, 0.0
        %v1128 = vadd.f32 %v1126, %v1127
        %v1129 = vsel %vm1115, %v1106, 0.0
        %v1130 = vadd.f32 %v1128, %v1129
        %v1131 = vsel %vm1115, %v1107, 0.0
        %v1132 = vadd.f32 %v1130, %v1131
        %v1133 = vsel %vm1115, %v1108, 0.0
        %v1134 = vadd.f32 %v1132, %v1133
        %v1135 = vsel %vm1115, %v1109, 0.0
        %v1136 = vadd.f32 %v1134, %v1135
        %v1137 = vsel %vm1115, %v1110, 0.0
        %v1138 = vadd.f32 %v1136, %v1137
        %v1139 = vsel %vm1115, %v1111, 0.0
        %v1140 = vadd.f32 %v1138, %v1139
        %v1141 = vsel %vm1115, %v1112, 0.0
        %v1142 = vadd.f32 %v1140, %v1141
        %v1143 = vsel %vm1115, %v1113, 0.0
        %v1144 = vadd.f32 %v1142, %v1143
        %v1145 = vsel %vm1115, %v1114, 0.0
        %v1146 = vadd.f32 %v1144, %v1145
        %1147 = vadd.xlane.f32.xlu0 %v1146
        %v1148 = vpop.xlane.xlu0 %1147
        %v1149 = vrot.slane %v1148, 4
        %v1150 = vadd.f32 %v1148, %v1149
        %v1151 = vrot.slane %v1150, 2
        %v1152 = vadd.f32 %v1150, %v1151
        %v1153 = vrot.slane %v1152, 1
        %v1154 = vadd.f32 %v1152, %v1153
        %s1155 = vtos %v1154
        %v1156 = vld [vmem:[%s323] sm:$0xff]
        %v1157 = vld [vmem:[%s327] sm:$0xff]
        %v1158 = vmul.f32 %v1156, 0.5
        %v1160 = vrot.slane %v1158, 2
        %v1162 = vsub.f32 %v1156, %v1160
        %v1163 = vadd.f32 %v1156, %v1160
        %v1164 = vmul.f32 %v1157, 0.5
        %v1166 = vrot.slane %v1164, 2
        %v1168 = vsub.f32 %v1157, %v1166
        %v1169 = vadd.f32 %v1157, %v1166
        %v1170 = vsub.f32 %v1162, %v1168
        %v1171 = vand.u32 2147483647, %v1170
        %v1172 = vsub.f32 %v1163, %v1169
        %v1173 = vand.u32 2147483647, %v1172
        %v1174 = vadd.f32 %v1171, %v1173
        %v1175 = vperm.slane %v1157, 4
        %v1176 = vmul.f32 %v1174, %v1175
        %vm1177 = vcmask 1041408
        %v1178 = vsel %vm1177, %v1176, 0.0
        %1179 = vadd.xlane.f32.xlu0 %v1178
        %v1180 = vpop.xlane.xlu0 %1179
        %v1181 = vrot.slane %v1180, 4
        %v1182 = vadd.f32 %v1180, %v1181
        %v1183 = vrot.slane %v1182, 2
        %v1184 = vadd.f32 %v1182, %v1183
        %v1185 = vrot.slane %v1184, 1
        %v1186 = vadd.f32 %v1184, %v1185
        %s1187 = vtos %v1186
        %v1188 = vmin.f32 %v1163, %v1169
        %v1189 = vmax.f32 %v1162, %v1168
        %v1190 = vsub.f32 %v1188, %v1189
        %v1191 = vmax.f32 %v1190, 0.0
        %v1193 = vrot.slane %v1191, 1
        %v1195 = vmul.f32 %v1191, %v1193
        %v1196 = vsub.f32 %v1163, %v1162
        %v1197 = vsub.f32 %v1169, %v1168
        %v1199 = vrot.slane %v1196, 1
        %v1201 = vmul.f32 %v1196, %v1199
        %v1203 = vrot.slane %v1197, 1
        %v1205 = vmul.f32 %v1197, %v1203
        %v1206 = vadd.f32 %v1201, %v1205
        %v1207 = vsub.f32 %v1206, %v1195
        %vm1208 = vcmp.gt.f32.partialorder %v1207, 0.0
        %v1209 = vsel %vm1208, %v1207, 1.0
        %v1210 = vrcp.pop %v1209
        %v1211 = vmul.f32 %v1209, %v1210
        %v1212 = vsub.f32 1.0, %v1211
        %v1213 = vmul.f32 %v1210, %v1212
        %v1214 = vadd.f32 %v1210, %v1213
        %vm1215 = vweird.f32 %v1209
        %vm1216 = vweird.f32 %v1210
        %vm1217 = vmor %vm1215, %vm1216
        %v1218 = vsel %vm1217, %v1210, %v1214
        %v1219 = vand.u32 2147483647, %v1209
        %vm1220 = vcmp.eq.f32.partialorder %v1219, 8.507059e+37
        %v1221 = vand.u32 %v1209, 2147483648
        %v1222 = vor.u32 1.1754944e-38, %v1221
        %v1223 = vsel %vm1220, %v1222, %v1218
        %v1224 = vmul.f32 %v1195, %v1223
        %v1225 = vsel %vm1208, %v1224, 0.0
        %v1226 = vmax.f32 %v1163, %v1169
        %v1227 = vmin.f32 %v1162, %v1168
        %v1228 = vsub.f32 %v1226, %v1227
        %v1229 = vmax.f32 %v1228, 0.0
        %v1231 = vrot.slane %v1229, 1
        %v1233 = vmul.f32 %v1229, %v1231
        %vm1234 = vcmp.gt.f32.partialorder %v1233, 0.0
        %v1235 = vsub.f32 %v1233, %v1207
        %v1236 = vsel %vm1234, %v1233, 1.0
        %v1237 = vrcp.pop %v1236
        %v1238 = vmul.f32 %v1236, %v1237
        %v1239 = vsub.f32 1.0, %v1238
        %v1240 = vmul.f32 %v1237, %v1239
        %v1241 = vadd.f32 %v1237, %v1240
        %vm1242 = vweird.f32 %v1236
        %vm1243 = vweird.f32 %v1237
        %vm1244 = vmor %vm1242, %vm1243
        %v1245 = vsel %vm1244, %v1237, %v1241
        %v1246 = vand.u32 2147483647, %v1236
        %vm1247 = vcmp.eq.f32.partialorder %v1246, 8.507059e+37
        %v1248 = vand.u32 %v1236, 2147483648
        %v1249 = vor.u32 1.1754944e-38, %v1248
        %v1250 = vsel %vm1247, %v1249, %v1245
        %v1251 = vmul.f32 %v1235, %v1250
        %v1252 = vsel %vm1234, %v1251, 0.0
        %v1253 = vsub.f32 %v1225, %v1252
        %v1254 = vsub.f32 1.0, %v1253
        %v1256 = vrot.slane %v1157, 4
        %v1258 = vmul.f32 %v1254, %v1256
        %vm1259 = vcmask 1040384
        %v1260 = vsel %vm1259, %v1258, 0.0
        %1261 = vadd.xlane.f32.xlu0 %v1260
        %v1262 = vpop.xlane.xlu0 %1261
        %v1263 = vrot.slane %v1262, 4
        %v1264 = vadd.f32 %v1262, %v1263
        %v1265 = vrot.slane %v1264, 2
        %v1266 = vadd.f32 %v1264, %v1265
        %v1267 = vrot.slane %v1266, 1
        %v1268 = vadd.f32 %v1266, %v1267
        %s1269 = vtos %v1268
        %v1271 = vrot.slane %v1168, 4
        %v1273 = vsub.f32 %v1156, %v1271
        %v1275 = vrot.slane %v1156, 4
        %v1277 = vsub.f32 %v1169, %v1275
        %v1279 = vrot.slane %v1277, 4
        %v1281 = vmin.f32 %v1273, %v1279
        %v1283 = vrot.slane %v1281, 1
        %v1285 = vmin.f32 %v1281, %v1283
        %vm1286 = vcmp.ge.f32.partialorder %v1285, 0.0
        %v1287 = vsel %vm1286, 1, 0
        %v1288 = vcvt.s32.f32 %v1287
        %v1289 = vsub.f32 1.0, %v1288
        %v1290 = vmul.f32 %v1289, %v1157
        %v1292 = vrot.slane %v1290, 4
        %v1294 = vsel %vm1259, %v1292, 0.0
        %1295 = vadd.xlane.f32.xlu0 %v1294
        %v1296 = vpop.xlane.xlu0 %1295
        %v1297 = vrot.slane %v1296, 4
        %v1298 = vadd.f32 %v1296, %v1297
        %v1299 = vrot.slane %v1298, 2
        %v1300 = vadd.f32 %v1298, %v1299
        %v1301 = vrot.slane %v1300, 1
        %v1302 = vadd.f32 %v1300, %v1301
        %s1303 = vtos %v1302
        %v1304 = vmul.f32 %v1225, %v1256
        %v1305 = vand.u32 2147483647, %v1156
        %v1306 = vsub.f32 0.0, %v1305
        %v1307 = vmul.f32 %v1306, 1.442695
        %v1308 = vpow.pop %v1307
        %v1309 = vadd.f32 %v1308, 1.0
        %v1310 = vrcp.pop %v1309
        %vm1311 = vcmp.ge.f32.partialorder %v1156, 0.0
        %v1312 = vmul.f32 %v1308, %v1310
        %v1313 = vsel %vm1311, %v1310, %v1312
        %v1314 = vmax.f32 %v1156, 0.0
        %v1316 = vrot.slane %v1304, 2
        %v1318 = vmul.f32 %v1156, %v1316
        %v1319 = vsub.f32 %v1314, %v1318
        %v1320 = vadd.f32 %v1308, 1.0
        %v1321 = vlog2.pop %v1320
        %v1322 = vmul.f32 %v1321, 0.6931472
        %v1323 = vmul.f32 -0.5, %v1308
        %v1324 = vadd.f32 %v1323, 1.0
        %v1325 = vmul.f32 %v1324, %v1308
        %v1326 = vand.u32 2147483647, %v1308
        %vm1327 = vcmp.lt.f32.partialorder %v1326, 0.0004427343
        %v1328 = vsel %vm1327, %v1325, %v1322
        %v1329 = vadd.f32 %v1319, %v1328
        %v1330 = vmul.f32 %v1313, %v1316
        %v1331 = vsub.f32 1.0, %v1313
        %v1332 = vsub.f32 1.0, %v1304
        %v1334 = vrot.slane %v1332, 2
        %v1336 = vmul.f32 %v1331, %v1334
        %v1337 = vadd.f32 %v1330, %v1336
        %v1338 = vsub.f32 1.0, %v1337
        %v1339 = vmul.f32 %v1338, %v1338
        %v1340 = vmul.f32 %v1329, %v1339
        %v1341 = vmul.f32 %v1304, 0.25
        %v1342 = vmul.f32 %v1332, 0.75
        %v1343 = vadd.f32 %v1341, %v1342
        %v1345 = vrot.slane %v1340, 6
        %v1347 = vmul.f32 %v1343, %v1345
        %v1348 = vrot.slane %v1157, 5
        %v1350 = vmul.f32 %v1347, %v1348
        %v1351 = vsel %vm1259, %v1350, 0.0
        %1352 = vadd.xlane.f32.xlu0 %v1351
        %v1353 = vpop.xlane.xlu0 %1352
        %v1354 = vrot.slane %v1353, 4
        %v1355 = vadd.f32 %v1353, %v1354
        %v1356 = vrot.slane %v1355, 2
        %v1357 = vadd.f32 %v1355, %v1356
        %v1358 = vrot.slane %v1357, 1
        %v1359 = vadd.f32 %v1357, %v1358
        %s1360 = vtos %v1359
        %v1361 = vld [vmem:[%s306] sm:$0x1]
        %v1362 = vstv %s1155
        %v1363 = vadd.f32 %v1361, %v1362
        %1364 = vst [vmem:[%s306] sm:$0x1] %v1363
        %v1365 = vld [vmem:[%s306 + $0x1] sm:$0x1]
        %v1366 = vstv %s1360
        %v1367 = vadd.f32 %v1365, %v1366
        %1368 = vst [vmem:[%s306 + $0x1] sm:$0x1] %v1367
        %v1369 = vld [vmem:[%s306 + $0x2] sm:$0x1]
        %v1370 = vstv %s1187
        %v1371 = vadd.f32 %v1369, %v1370
        %1372 = vst [vmem:[%s306 + $0x2] sm:$0x1] %v1371
        %v1373 = vld [vmem:[%s306 + $0x3] sm:$0x1]
        %v1374 = vstv %s1269
        %v1375 = vadd.f32 %v1373, %v1374
        %1376 = vst [vmem:[%s306 + $0x3] sm:$0x1] %v1375
        %v1377 = vld [vmem:[%s306 + $0x4] sm:$0x1]
        %v1378 = vstv %s1303
        %v1379 = vadd.f32 %v1377, %v1378
        %1380 = vst [vmem:[%s306 + $0x4] sm:$0x1] %v1379
        %s1381 = sand.u32 %s173, 1
        %s1382 = scalar_lea.sflag [#allocation3], %s1381
        %s1383 = sand.u32 %s173, 1
        %s1384 = smul.addr %s1383, 8
        %s1385 = scalar_lea.vmem [#allocation2], %s1384
        // Predicated region
        $region45: #{tpu_custom_call.1} parent=39 // pred_check
          %p1386 = pneg %p183
        $region46: #{tpu_custom_call.1} parent=39 // pred_check_branch
          %1388 = sbr.rel (%p1386) target = $region48
        $region47: #{tpu_custom_call.1} parent=39 // pred_region
          %1390 = vsyncadd %s1382, 0
          %s1391 = smul.addr %s23, 8
          %s1392 = scalar_lea.hbm %s5, %s1391
          %s1394 = sshll.u32 %s1385, 4
          %s1395 = int_to_ptr.vmem [resolvable:$true] %s1394
          %s1396 = sshll.u32 %s1392, 4
          %s1397 = int_to_ptr.hbm [resolvable:$true] %s1396
          %1399 = dma.vmem_to_hbm [thread:$0]  %s1395, 128, %s1397, %s1382
        $region48: #{tpu_custom_call.1} parent=39 // pred_fallthru
          _
      $region40: #{tpu_custom_call.1} parent=5 // pred_fallthru
        _
      %p1400 = scmp.le.s32.totalorder 2, %s14
      // Predicated region
      $region49: #{tpu_custom_call.1} parent=5 // pred_check
        %p1401 = pneg %p1400
      $region50: #{tpu_custom_call.1} parent=5 // pred_check_branch
        %1403 = sbr.rel (%p1401) target = $region52
      $region51: #{tpu_custom_call.1} parent=5 // pred_region
        %s1404 = ssub.s32 %s14, 2
        // Predicated region
        $region53: #{tpu_custom_call.1} parent=51 // pred_check
          %p1405 = pneg %p189
        $region54: #{tpu_custom_call.1} parent=51 // pred_check_branch
          %1407 = sbr.rel (%p1405) target = $region56
        $region55: #{tpu_custom_call.1} parent=51 // pred_region
          %s1408 = sand.u32 %s174, 1
          %s1409 = scalar_lea.sflag [#allocation3], %s1408
          %s1410 = sand.u32 %s174, 1
          %s1411 = smul.addr %s1410, 8
          %s1412 = scalar_lea.vmem [#allocation2], %s1411
          %1414 = dma.done %s1409, 128
        $region56: #{tpu_custom_call.1} parent=51 // pred_fallthru
          _
      $region52: #{tpu_custom_call.1} parent=5 // pred_fallthru
        _
    $region6: #{tpu_custom_call.1} parent=1 // loop_footer
      %s18 = sadd.s32 1, %s14
    $region7: #{tpu_custom_call.1} parent=1 // loop_footer_branch
      %13 = sbr.rel target = $region3
    $region8: #{tpu_custom_call.1} parent=1 // loop_exit
      _
    %1415 = vsyncpa [#allocation3], 1
    %s1416 = scalar_lea.sflag [#allocation3], 1
    %1417 = vsyncpa %s1416, 1

</llo_original>
